<compile_context>
chip_gen: v6e
topology: v6e:2x2x1
jax: 0.10.0
libtpu: 0.0.40
codegen_flags: <defaults>
</compile_context>

<pallas_src>
import functools

import jax
import jax.numpy as jnp
from jax import lax
from jax.experimental import pallas as pl
from jax.experimental.pallas import tpu as pltpu

NEG_SLOPE = 0.2


def _leaky_relu(v):
    return jnp.where(v > 0, v, NEG_SLOPE * v)


def _bottleneck_kernel(offsets, margin, x_ref, w1_ref, b1_ref, w2_ref, b2_ref,
                       mask_ref, o_ref):
    # x_ref:    (1, bc, Cp, F) f32     bc zero-padded, frame-aligned images
    # w1_ref:   (inter, 9*Cp) f32      tap-folded conv1 weights
    # b1_ref:   (inter, 1) f32
    # w2_ref:   (C_out, 9*inter) bf16  tap-folded conv2 weights
    # b2_ref:   (C_out, 1) f32
    # mask_ref: (1, bc*F) f32          1.0 at real (interior) pixel columns
    # o_ref:    (1, bc, C_out, F) f32
    bc = x_ref.shape[1]
    cp = x_ref.shape[2]
    f = x_ref.shape[3]
    nw = bc * f
    inter = w1_ref.shape[0]

    # --- pack the bc frames onto the lane axis (F % 128 == 0 => aligned) ----
    if bc == 1:
        x_img = x_ref[0, 0]                                     # (Cp, NW)
    else:
        x_img = jnp.concatenate([x_ref[0, b] for b in range(bc)], axis=-1)

    # Zero margins of width `margin` (multiple of 128 => aligned lane concat);
    # margin >= max |tap shift| so every static tap slice below stays in range.
    zx = jnp.zeros((cp, margin), x_img.dtype)
    x_ext = jnp.concatenate([zx, x_img, zx], axis=-1)           # (Cp, NW+2m)

    # --- conv1: tap-stacked operand (9*Cp, NW), ONE f32 MXU contraction -----
    x_stack = jnp.concatenate(
        [x_ext[:, margin + off: margin + off + nw] for off in offsets], axis=0)
    acc1 = jnp.dot(w1_ref[...], x_stack, preferred_element_type=jnp.float32)
    h = _leaky_relu(acc1 + b1_ref[...])                         # f32 VPU math
    # zero non-interior columns: they act as conv2's zero padding and stop
    # cross-frame bleed.
    h = (h * mask_ref[...]).astype(jnp.bfloat16)                # (inter, NW)

    # --- conv2: tap-stacked operand (9*inter, NW), ONE bf16 MXU contraction -
    zh = jnp.zeros((inter, margin), h.dtype)
    h_ext = jnp.concatenate([zh, h, zh], axis=-1)               # (inter, NW+2m)
    h_stack = jnp.concatenate(
        [h_ext[:, margin + off: margin + off + nw] for off in offsets], axis=0)
    # NOTE(v6e): K = 9*inter = 288 straddles the 256-deep MXU (256 + 32);
    # splitting the contraction 256+32 could buy ~10% there (not done).
    acc2 = jnp.dot(w2_ref[...], h_stack, preferred_element_type=jnp.float32)
    out = _leaky_relu(acc2 + b2_ref[...])                       # (C_out, NW)

    # scatter back into per-image frames (aligned 128-lane slices); output at
    # non-interior columns is garbage by design and sliced away in the wrapper.
    for b in range(bc):
        o_ref[0, b] = out[:, b * f:(b + 1) * f].astype(o_ref.dtype)


def bottleneck_block_forward(x, params, images_per_chunk=4):
    """x: (B, C_in, H, W) f32 NCHW.  Returns (B, C_in + C_out, H, W) f32."""
    conv1_w = params["conv1_w"]    # (inter, C_in, 3, 3)
    conv1_b = params["conv1_b"]    # (inter,)
    conv2_w = params["conv2_w"]    # (C_out, inter, 3, 3)
    conv2_b = params["conv2_b"]    # (C_out,)

    B, C_in, H, W = x.shape
    inter = conv1_w.shape[0]
    C_out = conv2_w.shape[0]

    Cp = ((C_in + 7) // 8) * 8                     # channel pad -> tile-aligned tap stack
    P = (H + 2) * (W + 2)                          # zero-padded image, flattened
    F = ((P + 127) // 128) * 128                   # lane-aligned per-image frame

    # >= 2 grid steps when B >= 2 so v7x megacore sharding + double-buffering engage.
    bc = max(1, min(images_per_chunk, B // 2)) if B >= 2 else 1
    n_chunks = -(-B // bc)
    B_pad = n_chunks * bc
    NW = bc * F

    # tap t = ky*3 + kx shifts the flattened padded image by this many columns
    offsets = tuple((ky - 1) * (W + 2) + (kx - 1)
                    for ky in range(3) for kx in range(3))
    MARGIN = ((max(abs(o) for o in offsets) + 127) // 128) * 128
    assert MARGIN >= max(abs(o) for o in offsets)  # tap slices stay in bounds
    assert F >= P                                  # interior reads stay in-frame

    # ---- pack input: spatial zero-pad -> flatten -> channel/frame pad.
    # No transpose and no HBM-side margin pad (margins are built in-kernel).
    xp = jnp.pad(x, ((0, B_pad - B), (0, 0), (1, 1), (1, 1)))
    xf = jnp.pad(xp.reshape(B_pad, C_in, P),
                 ((0, 0), (0, Cp - C_in), (0, F - P)))
    x_in = xf.reshape(n_chunks, bc, Cp, F).astype(jnp.float32)

    # ---- weights: tap-folded.  conv1 stays f32 (tiny K, exact); conv2 bf16.
    w1f = jnp.transpose(jnp.pad(conv1_w, ((0, 0), (0, Cp - C_in), (0, 0), (0, 0))),
                        (0, 2, 3, 1)).reshape(inter, 9 * Cp).astype(jnp.float32)
    w2f = jnp.transpose(conv2_w, (0, 2, 3, 1)).reshape(C_out, 9 * inter).astype(jnp.bfloat16)
    b1 = conv1_b.reshape(inter, 1).astype(jnp.float32)
    b2 = conv2_b.reshape(C_out, 1).astype(jnp.float32)

    # interior mask: 1.0 at columns holding a real (non-padding) pixel
    ry = jnp.arange(H + 2)
    rx = jnp.arange(W + 2)
    interior = (((ry >= 1) & (ry <= H))[:, None] &
                ((rx >= 1) & (rx <= W))[None, :]).reshape(P)
    mask = jnp.tile(jnp.pad(interior, (0, F - P)), bc).astype(jnp.float32)[None, :]

    out = pl.pallas_call(
        functools.partial(_bottleneck_kernel, offsets, MARGIN),
        out_shape=jax.ShapeDtypeStruct((n_chunks, bc, C_out, F), jnp.float32),
        grid_spec=pltpu.PrefetchScalarGridSpec(
            num_scalar_prefetch=0,
            grid=(n_chunks,),
            in_specs=[
                pl.BlockSpec((1, bc, Cp, F), lambda g: (g, 0, 0, 0)),
                pl.BlockSpec((inter, 9 * Cp), lambda g: (0, 0)),
                pl.BlockSpec((inter, 1), lambda g: (0, 0)),
                pl.BlockSpec((C_out, 9 * inter), lambda g: (0, 0)),
                pl.BlockSpec((C_out, 1), lambda g: (0, 0)),
                pl.BlockSpec((1, NW), lambda g: (0, 0)),
            ],
            out_specs=pl.BlockSpec((1, bc, C_out, F), lambda g: (g, 0, 0, 0)),
        ),
        compiler_params=pltpu.CompilerParams(
            dimension_semantics=("parallel",),
            # comfortably inside v7x's 64 MiB even at larger bc; re-derive if
            # images_per_chunk or H*W grows.
            vmem_limit_bytes=32 * 1024 * 1024,
        ),
    )(x_in, w1f, b1, w2f, b2, mask)

    # ---- unpack: (n_chunks, bc, C_out, F) -> (B, C_out, H, W), concat input
    out = out.reshape(B_pad, C_out, F)[:B, :, :P]
    out = out.reshape(B, C_out, H + 2, W + 2)[:, :, 1:H + 1, 1:W + 1]
    return jnp.concatenate([x, out], axis=1)


def bottleneck_block_ref(x, params):
    """Pure-JAX f32 reference mirroring the PyTorch forward."""
    def conv(v, w, b):
        out = lax.conv_general_dilated(
            v, w, window_strides=(1, 1), padding=((1, 1), (1, 1)),
            dimension_numbers=("NCHW", "OIHW", "NCHW"))
        return out + b[None, :, None, None]

    h = conv(x, params["conv1_w"], params["conv1_b"])
    h = jnp.where(h > 0, h, NEG_SLOPE * h)
    o = conv(h, params["conv2_w"], params["conv2_b"])
    o = jnp.where(o > 0, o, NEG_SLOPE * o)
    return jnp.concatenate([x, o], axis=1)


if __name__ == "__main__":
    B, in_planes, H, W = 2, 4, 16, 16
    out_planes = 8
    inter = out_planes * 4            # 32

    key = jax.random.PRNGKey(0)
    ks = jax.random.split(key, 5)
    x = jax.random.normal(ks[0], (B, in_planes, H, W), jnp.float32)
    params = {
        "conv1_w": 0.1 * jax.random.normal(ks[1], (inter, in_planes, 3, 3), jnp.float32),
        "conv1_b": 0.05 * jax.random.normal(ks[2], (inter,), jnp.float32),
        "conv2_w": 0.1 * jax.random.normal(ks[3], (out_planes, inter, 3, 3), jnp.float32),
        "conv2_b": 0.05 * jax.random.normal(ks[4], (out_planes,), jnp.float32),
    }

    out = jax.block_until_ready(bottleneck_block_forward(x, params))
    assert out.shape == (B, in_planes + out_planes, H, W), out.shape

    ref = bottleneck_block_ref(x, params)
    err = float(jnp.max(jnp.abs(out - ref)))
    # conv1 is exact f32; conv2 uses bf16 MXU operands with f32 accumulation
    assert err < 5e-2, f"max abs err too large: {err}"

    print("KERNEL_OK")
</pallas_src>

<mosaic_0001>
module attributes {stable_mosaic.version = 11 : i64} {
  func.func @_bottleneck_kernel(%arg0: i32, %arg1: memref<1x1x8x384xf32, #tpu.memory_space<vmem>>, %arg2: memref<32x72xf32, #tpu.memory_space<vmem>>, %arg3: memref<32x1xf32, #tpu.memory_space<vmem>>, %arg4: memref<8x288xbf16, #tpu.memory_space<vmem>>, %arg5: memref<8x1xf32, #tpu.memory_space<vmem>>, %arg6: memref<1x384xf32, #tpu.memory_space<vmem>>, %arg7: memref<1x1x8x384xf32, #tpu.memory_space<vmem>>) attributes {dimension_semantics = [#tpu.dimension_semantics<parallel>], iteration_bounds = array<i64: 2>, scalar_prefetch = 0 : i64, scratch_operands = 0 : i64, tpu.core_type = #tpu.core_type<tc>, window_params = [{transform_indices = @transform_0, window_bounds = array<i64: 1, 1, 8, 384>}, {pipeline_mode = #tpu.pipeline_mode<synchronous>, transform_indices = @transform_1, window_bounds = array<i64: 32, 72>}, {pipeline_mode = #tpu.pipeline_mode<synchronous>, transform_indices = @transform_2, window_bounds = array<i64: 32, 1>}, {pipeline_mode = #tpu.pipeline_mode<synchronous>, transform_indices = @transform_3, window_bounds = array<i64: 8, 288>}, {pipeline_mode = #tpu.pipeline_mode<synchronous>, transform_indices = @transform_4, window_bounds = array<i64: 8, 1>}, {pipeline_mode = #tpu.pipeline_mode<synchronous>, transform_indices = @transform_5, window_bounds = array<i64: 1, 384>}, {transform_indices = @transform_6, window_bounds = array<i64: 1, 1, 8, 384>}]} {
    %c0 = arith.constant 0 : index
    %c0_0 = arith.constant 0 : index
    %c0_1 = arith.constant 0 : index
    %c0_2 = arith.constant 0 : index
    %0 = vector.load %arg1[%c0, %c0_0, %c0_1, %c0_2] : memref<1x1x8x384xf32, #tpu.memory_space<vmem>>, vector<1x1x8x384xf32>
    %1 = vector.shape_cast %0 : vector<1x1x8x384xf32> to vector<8x384xf32>
    %cst = arith.constant 0.000000e+00 : f32
    %2 = vector.broadcast %cst : f32 to vector<8x128xf32>
    %3 = tpu.concatenate %2, %1, %2 in 1 : vector<8x128xf32>, vector<8x384xf32>, vector<8x128xf32> -> vector<8x640xf32>
    %4 = vector.extract_strided_slice %3 {offsets = [0, 109], sizes = [8, 384], strides = [1, 1]} : vector<8x640xf32> to vector<8x384xf32>
    %5 = vector.extract_strided_slice %3 {offsets = [0, 110], sizes = [8, 384], strides = [1, 1]} : vector<8x640xf32> to vector<8x384xf32>
    %6 = vector.extract_strided_slice %3 {offsets = [0, 111], sizes = [8, 384], strides = [1, 1]} : vector<8x640xf32> to vector<8x384xf32>
    %7 = vector.extract_strided_slice %3 {offsets = [0, 127], sizes = [8, 384], strides = [1, 1]} : vector<8x640xf32> to vector<8x384xf32>
    %8 = vector.extract_strided_slice %3 {offsets = [0, 128], sizes = [8, 384], strides = [1, 1]} : vector<8x640xf32> to vector<8x384xf32>
    %9 = vector.extract_strided_slice %3 {offsets = [0, 129], sizes = [8, 384], strides = [1, 1]} : vector<8x640xf32> to vector<8x384xf32>
    %10 = vector.extract_strided_slice %3 {offsets = [0, 145], sizes = [8, 384], strides = [1, 1]} : vector<8x640xf32> to vector<8x384xf32>
    %11 = vector.extract_strided_slice %3 {offsets = [0, 146], sizes = [8, 384], strides = [1, 1]} : vector<8x640xf32> to vector<8x384xf32>
    %12 = vector.extract_strided_slice %3 {offsets = [0, 147], sizes = [8, 384], strides = [1, 1]} : vector<8x640xf32> to vector<8x384xf32>
    %13 = tpu.concatenate %4, %5, %6, %7, %8, %9, %10, %11, %12 in 0 : vector<8x384xf32>, vector<8x384xf32>, vector<8x384xf32>, vector<8x384xf32>, vector<8x384xf32>, vector<8x384xf32>, vector<8x384xf32>, vector<8x384xf32>, vector<8x384xf32> -> vector<72x384xf32>
    %c0_3 = arith.constant 0 : index
    %c0_4 = arith.constant 0 : index
    %14 = vector.load %arg2[%c0_3, %c0_4] : memref<32x72xf32, #tpu.memory_space<vmem>>, vector<32x72xf32>
    %cst_5 = arith.constant dense<0.000000e+00> : vector<32x384xf32>
    %15 = tpu.matmul %14, %13, %cst_5 {dimension_numbers = #tpu.dot_dimension_numbers<[1], [0], [0], [1], [0, 0, 1, 1], [], []>} : vector<32x72xf32>, vector<72x384xf32>, vector<32x384xf32> -> vector<32x384xf32>
    %c0_6 = arith.constant 0 : index
    %c0_7 = arith.constant 0 : index
    %16 = vector.load %arg3[%c0_6, %c0_7] : memref<32x1xf32, #tpu.memory_space<vmem>>, vector<32x1xf32>
    %17 = vector.broadcast %16 : vector<32x1xf32> to vector<32x384xf32>
    %18 = arith.addf %15, %17 : vector<32x384xf32>
    %cst_8 = arith.constant 0.000000e+00 : f32
    %19 = vector.broadcast %cst_8 : f32 to vector<32x384xf32>
    %20 = arith.cmpf ogt, %18, %19 : vector<32x384xf32>
    %cst_9 = arith.constant 2.000000e-01 : f32
    %21 = vector.broadcast %cst_9 : f32 to vector<32x384xf32>
    %22 = arith.mulf %21, %18 : vector<32x384xf32>
    %23 = arith.select %20, %18, %22 : vector<32x384xi1>, vector<32x384xf32>
    %c0_10 = arith.constant 0 : index
    %c0_11 = arith.constant 0 : index
    %24 = vector.load %arg6[%c0_10, %c0_11] : memref<1x384xf32, #tpu.memory_space<vmem>>, vector<1x384xf32>
    %25 = vector.broadcast %24 : vector<1x384xf32> to vector<32x384xf32>
    %26 = arith.mulf %23, %25 : vector<32x384xf32>
    %27 = arith.truncf %26 : vector<32x384xf32> to vector<32x384xbf16>
    %cst_12 = arith.constant 0.000000e+00 : bf16
    %28 = vector.broadcast %cst_12 : bf16 to vector<32x128xbf16>
    %29 = tpu.concatenate %28, %27, %28 in 1 : vector<32x128xbf16>, vector<32x384xbf16>, vector<32x128xbf16> -> vector<32x640xbf16>
    %30 = vector.extract_strided_slice %29 {offsets = [0, 109], sizes = [32, 384], strides = [1, 1]} : vector<32x640xbf16> to vector<32x384xbf16>
    %31 = vector.extract_strided_slice %29 {offsets = [0, 110], sizes = [32, 384], strides = [1, 1]} : vector<32x640xbf16> to vector<32x384xbf16>
    %32 = vector.extract_strided_slice %29 {offsets = [0, 111], sizes = [32, 384], strides = [1, 1]} : vector<32x640xbf16> to vector<32x384xbf16>
    %33 = vector.extract_strided_slice %29 {offsets = [0, 127], sizes = [32, 384], strides = [1, 1]} : vector<32x640xbf16> to vector<32x384xbf16>
    %34 = vector.extract_strided_slice %29 {offsets = [0, 128], sizes = [32, 384], strides = [1, 1]} : vector<32x640xbf16> to vector<32x384xbf16>
    %35 = vector.extract_strided_slice %29 {offsets = [0, 129], sizes = [32, 384], strides = [1, 1]} : vector<32x640xbf16> to vector<32x384xbf16>
    %36 = vector.extract_strided_slice %29 {offsets = [0, 145], sizes = [32, 384], strides = [1, 1]} : vector<32x640xbf16> to vector<32x384xbf16>
    %37 = vector.extract_strided_slice %29 {offsets = [0, 146], sizes = [32, 384], strides = [1, 1]} : vector<32x640xbf16> to vector<32x384xbf16>
    %38 = vector.extract_strided_slice %29 {offsets = [0, 147], sizes = [32, 384], strides = [1, 1]} : vector<32x640xbf16> to vector<32x384xbf16>
    %39 = tpu.concatenate %30, %31, %32, %33, %34, %35, %36, %37, %38 in 0 : vector<32x384xbf16>, vector<32x384xbf16>, vector<32x384xbf16>, vector<32x384xbf16>, vector<32x384xbf16>, vector<32x384xbf16>, vector<32x384xbf16>, vector<32x384xbf16>, vector<32x384xbf16> -> vector<288x384xbf16>
    %c0_13 = arith.constant 0 : index
    %c0_14 = arith.constant 0 : index
    %40 = vector.load %arg4[%c0_13, %c0_14] : memref<8x288xbf16, #tpu.memory_space<vmem>>, vector<8x288xbf16>
    %cst_15 = arith.constant dense<0.000000e+00> : vector<8x384xf32>
    %41 = tpu.matmul %40, %39, %cst_15 {dimension_numbers = #tpu.dot_dimension_numbers<[1], [0], [0], [1], [0, 0, 1, 1], [], []>} : vector<8x288xbf16>, vector<288x384xbf16>, vector<8x384xf32> -> vector<8x384xf32>
    %c0_16 = arith.constant 0 : index
    %c0_17 = arith.constant 0 : index
    %42 = vector.load %arg5[%c0_16, %c0_17] : memref<8x1xf32, #tpu.memory_space<vmem>>, vector<8x1xf32>
    %43 = vector.broadcast %42 : vector<8x1xf32> to vector<8x384xf32>
    %44 = arith.addf %41, %43 : vector<8x384xf32>
    %cst_18 = arith.constant 0.000000e+00 : f32
    %45 = vector.broadcast %cst_18 : f32 to vector<8x384xf32>
    %46 = arith.cmpf ogt, %44, %45 : vector<8x384xf32>
    %cst_19 = arith.constant 2.000000e-01 : f32
    %47 = vector.broadcast %cst_19 : f32 to vector<8x384xf32>
    %48 = arith.mulf %47, %44 : vector<8x384xf32>
    %49 = arith.select %46, %44, %48 : vector<8x384xi1>, vector<8x384xf32>
    %c0_20 = arith.constant 0 : index
    %c0_21 = arith.constant 0 : index
    %c0_22 = arith.constant 0 : index
    %c0_23 = arith.constant 0 : index
    %50 = vector.load %arg7[%c0_20, %c0_21, %c0_22, %c0_23] : memref<1x1x8x384xf32, #tpu.memory_space<vmem>>, vector<1x1x8x384xf32>
    %51 = vector.shape_cast %50 : vector<1x1x8x384xf32> to vector<8x384xf32>
    %52 = vector.shape_cast %49 : vector<8x384xf32> to vector<1x1x8x384xf32>
    tpu.vector_store %arg7[%c0_20, %c0_21, %c0_22, %c0_23], %52 {strides = array<i32>} : memref<1x1x8x384xf32, #tpu.memory_space<vmem>>, vector<1x1x8x384xf32>,
    return
  }
  func.func @transform_0(%arg0: i32) -> (i32, i32, i32, i32) {
    %c0_i32 = arith.constant 0 : i32
    %c0_i32_0 = arith.constant 0 : i32
    %c0_i32_1 = arith.constant 0 : i32
    %c0_i32_2 = arith.constant 0 : i32
    return %arg0, %c0_i32, %c0_i32_0, %c0_i32_1 : i32, i32, i32, i32
  }
  func.func @transform_1(%arg0: i32) -> (i32, i32) {
    %c0_i32 = arith.constant 0 : i32
    %c0_i32_0 = arith.constant 0 : i32
    %c0_i32_1 = arith.constant 0 : i32
    return %c0_i32, %c0_i32_0 : i32, i32
  }
  func.func @transform_2(%arg0: i32) -> (i32, i32) {
    %c0_i32 = arith.constant 0 : i32
    %c0_i32_0 = arith.constant 0 : i32
    %c0_i32_1 = arith.constant 0 : i32
    return %c0_i32, %c0_i32_0 : i32, i32
  }
  func.func @transform_3(%arg0: i32) -> (i32, i32) {
    %c0_i32 = arith.constant 0 : i32
    %c0_i32_0 = arith.constant 0 : i32
    %c0_i32_1 = arith.constant 0 : i32
    return %c0_i32, %c0_i32_0 : i32, i32
  }
  func.func @transform_4(%arg0: i32) -> (i32, i32) {
    %c0_i32 = arith.constant 0 : i32
    %c0_i32_0 = arith.constant 0 : i32
    %c0_i32_1 = arith.constant 0 : i32
    return %c0_i32, %c0_i32_0 : i32, i32
  }
  func.func @transform_5(%arg0: i32) -> (i32, i32) {
    %c0_i32 = arith.constant 0 : i32
    %c0_i32_0 = arith.constant 0 : i32
    %c0_i32_1 = arith.constant 0 : i32
    return %c0_i32, %c0_i32_0 : i32, i32
  }
  func.func @transform_6(%arg0: i32) -> (i32, i32, i32, i32) {
    %c0_i32 = arith.constant 0 : i32
    %c0_i32_0 = arith.constant 0 : i32
    %c0_i32_1 = arith.constant 0 : i32
    %c0_i32_2 = arith.constant 0 : i32
    return %arg0, %c0_i32, %c0_i32_0, %c0_i32_1 : i32, i32, i32, i32
  }
}

</mosaic_0001>

<llo_original>
// kernel: tpu_custom_call.1
$region0: #{tpu_custom_call.1}
  #allocation0 [shape = 'u32[]', space=smem, size = 0x4, offset = 0x4, fixed_abs, tag = 'smem constant byte address 0x4 - core index']
  #allocation1 [shape = 'u32[144,128]{1,0:T(1,128)}', space=vmem, size = 0x12000, scoped, tag = 'internal scratch']
  %s0 = inlined_call_operand.hbm [shape: f32[2,1,8,384], index: 0, kind: input, shape index: {}]
  %s1 = inlined_call_operand.vmem [shape: f32[32,72], index: 1, kind: input, shape index: {}]
  %s2 = inlined_call_operand.vmem [shape: f32[32,1], index: 2, kind: input, shape index: {}]
  %s3 = inlined_call_operand.vmem [shape: bf16[8,288], index: 3, kind: input, shape index: {}]
  %s4 = inlined_call_operand.vmem [shape: f32[8,1], index: 4, kind: input, shape index: {}]
  %s5 = inlined_call_operand.vmem [shape: f32[1,384], index: 5, kind: input, shape index: {}]
  %s6 = inlined_call_operand.hbm [shape: f32[2,1,8,384], index: 6, kind: output, shape index: {}]
  %s7 = sld [smem:[#allocation0]]
  $region61: #{tpu_custom_call.1} parent=0
    _
  %s9 = ssub.s32 1, %s7
  %s10 = scalar_select 0, %s9, %s7
  $region1: #{tpu_custom_call.1} parent=0
    #allocation2 [shape = 'u8[24576]{0}', space=vmem, size = 0x6000, scoped, tag = 'input window, operand 0']
    #allocation3 [shape = 's32[2]{0}', space=sflag, size = 0x8, scoped, tag = 'scoped memory for tpu_custom_call.1']
    #allocation4 [shape = 's32[2]{0}', space=sflag, size = 0x8, scoped, tag = 'scoped memory for tpu_custom_call.1']
    #allocation5 [shape = 'u8[24576]{0}', space=vmem, size = 0x6000, scoped, tag = 'output window, operand 0']
    %11 = vsyncpa [#allocation3], 0
    %s12 = scalar_lea.sflag [#allocation3], 1
    %13 = vsyncpa %s12, 0
    %14 = vsyncpa [#allocation4], 0
    %s15 = scalar_lea.sflag [#allocation4], 1
    %16 = vsyncpa %s15, 0
    loop: start=0, step=1, limit=4
    $region2: #{tpu_custom_call.1} parent=1 // loop_pre_header
      _
    $region3: #{tpu_custom_call.1} parent=1 // loop_header
      %s18 = sphi 0, %s22
      %p19 = scmp.ge.s32.totalorder %s18, 4
      %s28 = sphi 0, %s30
      %s31 = sphi 0, %s28
      %s32 = sphi 0, %s31
      %s48 = sphi 0, %s32
      %s52 = sphi 0, %s52
      %s54 = sphi 0, %s52
      %s55 = sphi 0, %s54
      %s69 = sphi 0, %s55
      %s73 = sphi 0, %s73
      %s75 = sphi 0, %s73
      %s76 = sphi 0, %s75
      %s90 = sphi 0, %s76
      %s94 = sphi 0, %s94
      %s96 = sphi 0, %s94
      %s97 = sphi 0, %s96
      %s111 = sphi 0, %s97
      %s115 = sphi 0, %s115
      %s117 = sphi 0, %s115
      %s118 = sphi 0, %s117
      %s132 = sphi 0, %s118
      %s136 = sphi 0, %s136
      %s138 = sphi 0, %s136
      %s139 = sphi 0, %s138
      %s153 = sphi 0, %s139
      %s159 = sphi 0, %s161
      %s162 = sphi 0, %s159
      %s163 = sphi 0, %s162
      %s179 = sphi 0, %s163
    $region4: #{tpu_custom_call.1} parent=1 // loop_header_branch
      %21 = sbr.rel (%p19) target = $region8
    $region5: #{tpu_custom_call.1} parent=1 // loop_body
      %s23 = ssub.s32 %s18, 1
      %s24 = ssub.s32 %s18, 2
      %s25 = sadd.s32 %s18, 1
      %s26 = ssub.s32 %s18, %s25
      %p27 = scmp.eq.s32.totalorder %s26, 0
      %s29 = sadd.s32 %s28, 1
      %s30 = scalar_select %p27, %s28, %s29
      %p33 = pneg %p27
      %p34 = scmp.eq.s32.totalorder %s18, 1
      %p35 = por %p33, %p34
      %p36 = scmp.ne.s32.totalorder %s28, %s31
      %p37 = scmp.eq.s32.totalorder %s18, 0
      %p38 = por %p36, %p37
      %p39 = scmp.ne.s32.totalorder %s28, %s31
      %p40 = scmp.eq.s32.totalorder %s23, 1
      %p41 = por %p39, %p40
      %p42 = scmp.ne.s32.totalorder %s31, %s32
      %p43 = scmp.eq.s32.totalorder %s23, 0
      %p44 = por %p42, %p43
      %p45 = scmp.ne.s32.totalorder %s31, %s32
      %p46 = scmp.eq.s32.totalorder %s24, 1
      %p47 = por %p45, %p46
      %p49 = scmp.ne.s32.totalorder %s32, %s48
      %p50 = scmp.eq.s32.totalorder %s24, 0
      %p51 = por %p49, %p50
      %s53 = sadd.s32 %s52, 1
      %p56 = scmp.eq.s32.totalorder %s18, 1
      %p57 = scmp.ne.s32.totalorder %s52, %s54
      %p58 = scmp.eq.s32.totalorder %s18, 0
      %p59 = por %p57, %p58
      %p60 = scmp.ne.s32.totalorder %s52, %s54
      %p61 = scmp.eq.s32.totalorder %s23, 1
      %p62 = por %p60, %p61
      %p63 = scmp.ne.s32.totalorder %s54, %s55
      %p64 = scmp.eq.s32.totalorder %s23, 0
      %p65 = por %p63, %p64
      %p66 = scmp.ne.s32.totalorder %s54, %s55
      %p67 = scmp.eq.s32.totalorder %s24, 1
      %p68 = por %p66, %p67
      %p70 = scmp.ne.s32.totalorder %s55, %s69
      %p71 = scmp.eq.s32.totalorder %s24, 0
      %p72 = por %p70, %p71
      %s74 = sadd.s32 %s73, 1
      %p77 = scmp.eq.s32.totalorder %s18, 1
      %p78 = scmp.ne.s32.totalorder %s73, %s75
      %p79 = scmp.eq.s32.totalorder %s18, 0
      %p80 = por %p78, %p79
      %p81 = scmp.ne.s32.totalorder %s73, %s75
      %p82 = scmp.eq.s32.totalorder %s23, 1
      %p83 = por %p81, %p82
      %p84 = scmp.ne.s32.totalorder %s75, %s76
      %p85 = scmp.eq.s32.totalorder %s23, 0
      %p86 = por %p84, %p85
      %p87 = scmp.ne.s32.totalorder %s75, %s76
      %p88 = scmp.eq.s32.totalorder %s24, 1
      %p89 = por %p87, %p88
      %p91 = scmp.ne.s32.totalorder %s76, %s90
      %p92 = scmp.eq.s32.totalorder %s24, 0
      %p93 = por %p91, %p92
      %s95 = sadd.s32 %s94, 1
      %p98 = scmp.eq.s32.totalorder %s18, 1
      %p99 = scmp.ne.s32.totalorder %s94, %s96
      %p100 = scmp.eq.s32.totalorder %s18, 0
      %p101 = por %p99, %p100
      %p102 = scmp.ne.s32.totalorder %s94, %s96
      %p103 = scmp.eq.s32.totalorder %s23, 1
      %p104 = por %p102, %p103
      %p105 = scmp.ne.s32.totalorder %s96, %s97
      %p106 = scmp.eq.s32.totalorder %s23, 0
      %p107 = por %p105, %p106
      %p108 = scmp.ne.s32.totalorder %s96, %s97
      %p109 = scmp.eq.s32.totalorder %s24, 1
      %p110 = por %p108, %p109
      %p112 = scmp.ne.s32.totalorder %s97, %s111
      %p113 = scmp.eq.s32.totalorder %s24, 0
      %p114 = por %p112, %p113
      %s116 = sadd.s32 %s115, 1
      %p119 = scmp.eq.s32.totalorder %s18, 1
      %p120 = scmp.ne.s32.totalorder %s115, %s117
      %p121 = scmp.eq.s32.totalorder %s18, 0
      %p122 = por %p120, %p121
      %p123 = scmp.ne.s32.totalorder %s115, %s117
      %p124 = scmp.eq.s32.totalorder %s23, 1
      %p125 = por %p123, %p124
      %p126 = scmp.ne.s32.totalorder %s117, %s118
      %p127 = scmp.eq.s32.totalorder %s23, 0
      %p128 = por %p126, %p127
      %p129 = scmp.ne.s32.totalorder %s117, %s118
      %p130 = scmp.eq.s32.totalorder %s24, 1
      %p131 = por %p129, %p130
      %p133 = scmp.ne.s32.totalorder %s118, %s132
      %p134 = scmp.eq.s32.totalorder %s24, 0
      %p135 = por %p133, %p134
      %s137 = sadd.s32 %s136, 1
      %p140 = scmp.eq.s32.totalorder %s18, 1
      %p141 = scmp.ne.s32.totalorder %s136, %s138
      %p142 = scmp.eq.s32.totalorder %s18, 0
      %p143 = por %p141, %p142
      %p144 = scmp.ne.s32.totalorder %s136, %s138
      %p145 = scmp.eq.s32.totalorder %s23, 1
      %p146 = por %p144, %p145
      %p147 = scmp.ne.s32.totalorder %s138, %s139
      %p148 = scmp.eq.s32.totalorder %s23, 0
      %p149 = por %p147, %p148
      %p150 = scmp.ne.s32.totalorder %s138, %s139
      %p151 = scmp.eq.s32.totalorder %s24, 1
      %p152 = por %p150, %p151
      %p154 = scmp.ne.s32.totalorder %s139, %s153
      %p155 = scmp.eq.s32.totalorder %s24, 0
      %p156 = por %p154, %p155
      %s157 = ssub.s32 %s18, %s25
      %p158 = scmp.eq.s32.totalorder %s157, 0
      %s160 = sadd.s32 %s159, 1
      %s161 = scalar_select %p158, %s159, %s160
      %p164 = pneg %p158
      %p165 = scmp.eq.s32.totalorder %s18, 1
      %p166 = por %p164, %p165
      %p167 = scmp.ne.s32.totalorder %s159, %s162
      %p168 = scmp.eq.s32.totalorder %s18, 0
      %p169 = por %p167, %p168
      %p170 = scmp.ne.s32.totalorder %s159, %s162
      %p171 = scmp.eq.s32.totalorder %s23, 1
      %p172 = por %p170, %p171
      %p173 = scmp.ne.s32.totalorder %s162, %s163
      %p174 = scmp.eq.s32.totalorder %s23, 0
      %p175 = por %p173, %p174
      %p176 = scmp.ne.s32.totalorder %s162, %s163
      %p177 = scmp.eq.s32.totalorder %s24, 1
      %p178 = por %p176, %p177
      %p180 = scmp.ne.s32.totalorder %s163, %s179
      %p181 = scmp.eq.s32.totalorder %s24, 0
      %p182 = por %p180, %p181
      %p183 = scmp.le.s32.totalorder 1, %s18
      %p184 = scmp.lt.s32.totalorder %s18, 3
      %p185 = pnand %p183, %p184
      %p186 = pneg %p185
      // Predicated region
      $region9: #{tpu_custom_call.1} parent=5 // pred_check
        _
      $region10: #{tpu_custom_call.1} parent=5 // pred_check_branch
        %188 = sbr.rel (%p185) target = $region12
      $region11: #{tpu_custom_call.1} parent=5 // pred_region
        %s189 = ssub.s32 %s18, 1
        // Predicated region
        $region13: #{tpu_custom_call.1} parent=11 // pred_check
          %p190 = pneg %p65
        $region14: #{tpu_custom_call.1} parent=11 // pred_check_branch
          %192 = sbr.rel (%p190) target = $region16
        $region15: #{tpu_custom_call.1} parent=11 // pred_region
          _
        $region16: #{tpu_custom_call.1} parent=11 // pred_fallthru
          _
        // Predicated region
        $region17: #{tpu_custom_call.1} parent=11 // pred_check
          %p193 = pneg %p86
        $region18: #{tpu_custom_call.1} parent=11 // pred_check_branch
          %195 = sbr.rel (%p193) target = $region20
        $region19: #{tpu_custom_call.1} parent=11 // pred_region
          _
        $region20: #{tpu_custom_call.1} parent=11 // pred_fallthru
          _
        // Predicated region
        $region21: #{tpu_custom_call.1} parent=11 // pred_check
          %p196 = pneg %p107
        $region22: #{tpu_custom_call.1} parent=11 // pred_check_branch
          %198 = sbr.rel (%p196) target = $region24
        $region23: #{tpu_custom_call.1} parent=11 // pred_region
          _
        $region24: #{tpu_custom_call.1} parent=11 // pred_fallthru
          _
        // Predicated region
        $region25: #{tpu_custom_call.1} parent=11 // pred_check
          %p199 = pneg %p128
        $region26: #{tpu_custom_call.1} parent=11 // pred_check_branch
          %201 = sbr.rel (%p199) target = $region28
        $region27: #{tpu_custom_call.1} parent=11 // pred_region
          _
        $region28: #{tpu_custom_call.1} parent=11 // pred_fallthru
          _
        // Predicated region
        $region29: #{tpu_custom_call.1} parent=11 // pred_check
          %p202 = pneg %p149
        $region30: #{tpu_custom_call.1} parent=11 // pred_check_branch
          %204 = sbr.rel (%p202) target = $region32
        $region31: #{tpu_custom_call.1} parent=11 // pred_region
          _
        $region32: #{tpu_custom_call.1} parent=11 // pred_fallthru
          _
      $region12: #{tpu_custom_call.1} parent=5 // pred_fallthru
        _
      %p205 = scmp.lt.s32.totalorder %s18, 2
      // Predicated region
      $region33: #{tpu_custom_call.1} parent=5 // pred_check
        %p206 = pneg %p205
      $region34: #{tpu_custom_call.1} parent=5 // pred_check_branch
        %208 = sbr.rel (%p206) target = $region36
      $region35: #{tpu_custom_call.1} parent=5 // pred_region
        // Predicated region
        $region37: #{tpu_custom_call.1} parent=35 // pred_check
          %p209 = pneg %p38
        $region38: #{tpu_custom_call.1} parent=35 // pred_check_branch
          %211 = sbr.rel (%p209) target = $region40
        $region39: #{tpu_custom_call.1} parent=35 // pred_region
          %s212 = sand.u32 %s28, 1
          %s213 = scalar_lea.sflag [#allocation3], %s212
          %s214 = sand.u32 %s28, 1
          %s215 = smul.addr %s214, 24
          %s216 = scalar_lea.vmem [#allocation2], %s215
          %s218 = ssub.s32 384, 384
          %219 = vsyncadd %s213, %s218
          %s220 = smul.addr %s18, 3
          %s221 = smul.addr %s220, 128
          %s222 = scalar_lea.hbm %s0, %s221
          %s224 = sshll.u32 %s216, 4
          %s225 = int_to_ptr.vmem [resolvable:$true] %s224
          %227 = dma.hbm_to_vmem [thread:$0]  %s222, 384, %s225, %s213
        $region40: #{tpu_custom_call.1} parent=35 // pred_fallthru
          _
      $region36: #{tpu_custom_call.1} parent=5 // pred_fallthru
        _
      %p228 = scmp.le.s32.totalorder 1, %s18
      %p229 = scmp.lt.s32.totalorder %s18, 3
      %p230 = pnand %p228, %p229
      %p231 = pneg %p230
      // Predicated region
      $region41: #{tpu_custom_call.1} parent=5 // pred_check
        _
      $region42: #{tpu_custom_call.1} parent=5 // pred_check_branch
        %233 = sbr.rel (%p230) target = $region44
      $region43: #{tpu_custom_call.1} parent=5 // pred_region
        %s234 = ssub.s32 %s18, 1
        %s235 = sand.u32 %s31, 1
        %s236 = scalar_lea.sflag [#allocation3], %s235
        %s237 = sand.u32 %s31, 1
        %s238 = smul.addr %s237, 24
        %s239 = scalar_lea.vmem [#allocation2], %s238
        // Predicated region
        $region45: #{tpu_custom_call.1} parent=43 // pred_check
          %p240 = pneg %p44
        $region46: #{tpu_custom_call.1} parent=43 // pred_check_branch
          %242 = sbr.rel (%p240) target = $region48
        $region47: #{tpu_custom_call.1} parent=43 // pred_region
          %243 = dma.done %s236, 384
        $region48: #{tpu_custom_call.1} parent=43 // pred_fallthru
          _
        %s244 = sand.u32 %s31, 1
        %s245 = scalar_lea.sflag [#allocation3], %s244
        %s246 = sand.u32 %s31, 1
        %s247 = smul.addr %s246, 24
        %s248 = scalar_lea.vmem [#allocation2], %s247
        %p249 = pneg %p44
        %p250 = pneg %p41
        %p251 = pneg %p65
        %p252 = pneg %p62
        %p253 = pneg %p86
        %p254 = pneg %p83
        %p255 = pneg %p107
        %p256 = pneg %p104
        %p257 = pneg %p128
        %p258 = pneg %p125
        %p259 = pneg %p149
        %p260 = pneg %p146
        %p261 = pneg %p175
        %p262 = pneg %p172
        %s263 = sand.u32 %s162, 1
        %s264 = scalar_lea.sflag [#allocation4], %s263
        %s265 = sand.u32 %s162, 1
        %s266 = smul.addr %s265, 24
        %s267 = scalar_lea.vmem [#allocation5], %s266
        %v269 = vld [vmem:[%s239] sm:$0xff]
        %v270 = vld [vmem:[%s239 + $0x8] sm:$0xff]
        %v271 = vld [vmem:[%s239 + $0x10] sm:$0xff]
        %276 = vrot.lane.b32.xlu0 0.0, 127
        %v277 = vpop.permute.xlu0 %276
        %278 = vrot.lane.b32.xlu0 %v269, 127
        %v279 = vpop.permute.xlu0 %278
        %280 = vrot.lane.b32.xlu0 %v270, 127
        %v281 = vpop.permute.xlu0 %280
        %282 = vrot.lane.b32.xlu0 %v271, 127
        %v283 = vpop.permute.xlu0 %282
        %vm284 = vcmask 1039360
        %v285 = vsel %vm284, %v277, %v279
        %v286 = vsel %vm284, %v279, %v281
        %v287 = vsel %vm284, %v281, %v283
        %288 = vrot.lane.b32.xlu0 0.0, 126
        %v289 = vpop.permute.xlu0 %288
        %290 = vrot.lane.b32.xlu0 %v269, 126
        %v291 = vpop.permute.xlu0 %290
        %292 = vrot.lane.b32.xlu0 %v270, 126
        %v293 = vpop.permute.xlu0 %292
        %294 = vrot.lane.b32.xlu0 %v271, 126
        %v295 = vpop.permute.xlu0 %294
        %vm296 = vcmask 1031168
        %v297 = vsel %vm296, %v289, %v291
        %v298 = vsel %vm296, %v291, %v293
        %v299 = vsel %vm296, %v293, %v295
        %300 = vrot.lane.b32.xlu0 0.0, 110
        %v301 = vpop.permute.xlu0 %300
        %302 = vrot.lane.b32.xlu0 %v269, 110
        %v303 = vpop.permute.xlu0 %302
        %304 = vrot.lane.b32.xlu0 %v270, 110
        %v305 = vpop.permute.xlu0 %304
        %306 = vrot.lane.b32.xlu0 %v271, 110
        %v307 = vpop.permute.xlu0 %306
        %vm308 = vcmask 900096
        %v309 = vsel %vm308, %v301, %v303
        %v310 = vsel %vm308, %v303, %v305
        %v311 = vsel %vm308, %v305, %v307
        %312 = vrot.lane.b32.xlu0 %v269, 109
        %v313 = vpop.permute.xlu0 %312
        %314 = vrot.lane.b32.xlu0 %v270, 109
        %v315 = vpop.permute.xlu0 %314
        %316 = vrot.lane.b32.xlu0 %v271, 109
        %v317 = vpop.permute.xlu0 %316
        %vm318 = vcmask 891904
        %v319 = vsel %vm318, %v313, %v315
        %v320 = vsel %vm318, %v315, %v317
        %321 = vrot.lane.b32.xlu0 %v269, 108
        %v322 = vpop.permute.xlu0 %321
        %323 = vrot.lane.b32.xlu0 %v270, 108
        %v324 = vpop.permute.xlu0 %323
        %325 = vrot.lane.b32.xlu0 %v271, 108
        %v326 = vpop.permute.xlu0 %325
        %327 = vrot.lane.b32.xlu0 0.0, 108
        %v328 = vpop.permute.xlu0 %327
        %vm329 = vcmask 883712
        %v330 = vsel %vm329, %v322, %v324
        %v331 = vsel %vm329, %v324, %v326
        %v332 = vsel %vm329, %v326, %v328
        %333 = vrot.lane.b32.xlu0 %v269, 92
        %v334 = vpop.permute.xlu0 %333
        %335 = vrot.lane.b32.xlu0 %v270, 92
        %v336 = vpop.permute.xlu0 %335
        %337 = vrot.lane.b32.xlu0 %v271, 92
        %v338 = vpop.permute.xlu0 %337
        %339 = vrot.lane.b32.xlu0 0.0, 92
        %v340 = vpop.permute.xlu0 %339
        %vm341 = vcmask 752640
        %v342 = vsel %vm341, %v334, %v336
        %v343 = vsel %vm341, %v336, %v338
        %v344 = vsel %vm341, %v338, %v340
        %345 = vrot.lane.b32.xlu0 %v269, 91
        %v346 = vpop.permute.xlu0 %345
        %347 = vrot.lane.b32.xlu0 %v270, 91
        %v348 = vpop.permute.xlu0 %347
        %349 = vrot.lane.b32.xlu0 %v271, 91
        %v350 = vpop.permute.xlu0 %349
        %351 = vrot.lane.b32.xlu0 0.0, 91
        %v352 = vpop.permute.xlu0 %351
        %vm353 = vcmask 744448
        %v354 = vsel %vm353, %v346, %v348
        %v355 = vsel %vm353, %v348, %v350
        %v356 = vsel %vm353, %v350, %v352
        %357 = vrot.lane.b32.xlu0 %v269, 90
        %v358 = vpop.permute.xlu0 %357
        %359 = vrot.lane.b32.xlu0 %v270, 90
        %v360 = vpop.permute.xlu0 %359
        %361 = vrot.lane.b32.xlu0 %v271, 90
        %v362 = vpop.permute.xlu0 %361
        %363 = vrot.lane.b32.xlu0 0.0, 90
        %v364 = vpop.permute.xlu0 %363
        %vm365 = vcmask 736256
        %v366 = vsel %vm365, %v358, %v360
        %v367 = vsel %vm365, %v360, %v362
        %v368 = vsel %vm365, %v362, %v364
        %v369 = vld [vmem:[%s1] sm:$0xff]
        %v370 = vld [vmem:[%s1 + $0x8] sm:$0xff]
        %v371 = vld [vmem:[%s1 + $0x10] sm:$0xff]
        %v372 = vld [vmem:[%s1 + $0x18] sm:$0xff]
        %v373 = vld [vmem:[%s2] sm:$0xff]
        %v374 = vld [vmem:[%s2 + $0x8] sm:$0xff]
        %v375 = vld [vmem:[%s2 + $0x10] sm:$0xff]
        %v376 = vld [vmem:[%s2 + $0x18] sm:$0xff]
        %378 = vset.pattern.permute.xlu0 0
        %379 = vperm.xlu0 %378, %v373
        %v380 = vpop.permute.xlu0 %379
        %383 = vset.pattern.permute.xlu0 0
        %384 = vperm.xlu0 %383, %v374
        %v385 = vpop.permute.xlu0 %384
        %388 = vset.pattern.permute.xlu0 0
        %389 = vperm.xlu0 %388, %v375
        %v390 = vpop.permute.xlu0 %389
        %393 = vset.pattern.permute.xlu0 0
        %394 = vperm.xlu0 %393, %v376
        %v395 = vpop.permute.xlu0 %394
        %397 = vrot.lane.b32.xlu0 0.0, 19
        %v398 = vpop.permute.xlu0 %397
        %399 = vrot.lane.b32.xlu0 %v269, 19
        %v400 = vpop.permute.xlu0 %399
        %401 = vrot.lane.b32.xlu0 %v270, 19
        %v402 = vpop.permute.xlu0 %401
        %403 = vrot.lane.b32.xlu0 %v271, 19
        %v404 = vpop.permute.xlu0 %403
        %405 = vrot.lane.b32.xlu0 %v285, 19
        %v406 = vpop.permute.xlu0 %405
        %407 = vrot.lane.b32.xlu0 %v286, 19
        %v408 = vpop.permute.xlu0 %407
        %409 = vrot.lane.b32.xlu0 %v287, 19
        %v410 = vpop.permute.xlu0 %409
        %411 = vrot.lane.b32.xlu0 %v283, 19
        %v412 = vpop.permute.xlu0 %411
        %413 = vrot.lane.b32.xlu0 %v297, 19
        %v414 = vpop.permute.xlu0 %413
        %415 = vrot.lane.b32.xlu0 %v298, 19
        %v416 = vpop.permute.xlu0 %415
        %417 = vrot.lane.b32.xlu0 %v299, 19
        %v418 = vpop.permute.xlu0 %417
        %419 = vrot.lane.b32.xlu0 %v295, 19
        %v420 = vpop.permute.xlu0 %419
        %421 = vrot.lane.b32.xlu0 %v309, 19
        %v422 = vpop.permute.xlu0 %421
        %423 = vrot.lane.b32.xlu0 %v310, 19
        %v424 = vpop.permute.xlu0 %423
        %425 = vrot.lane.b32.xlu0 %v311, 19
        %v426 = vpop.permute.xlu0 %425
        %427 = vrot.lane.b32.xlu0 %v307, 19
        %v428 = vpop.permute.xlu0 %427
        %429 = vrot.lane.b32.xlu0 %v313, 19
        %v430 = vpop.permute.xlu0 %429
        %431 = vrot.lane.b32.xlu0 %v319, 19
        %v432 = vpop.permute.xlu0 %431
        %433 = vrot.lane.b32.xlu0 %v320, 19
        %v434 = vpop.permute.xlu0 %433
        %435 = vrot.lane.b32.xlu0 %v317, 19
        %v436 = vpop.permute.xlu0 %435
        %437 = vrot.lane.b32.xlu0 %v322, 19
        %v438 = vpop.permute.xlu0 %437
        %439 = vrot.lane.b32.xlu0 %v330, 19
        %v440 = vpop.permute.xlu0 %439
        %441 = vrot.lane.b32.xlu0 %v331, 19
        %v442 = vpop.permute.xlu0 %441
        %443 = vrot.lane.b32.xlu0 %v332, 19
        %v444 = vpop.permute.xlu0 %443
        %445 = vrot.lane.b32.xlu0 %v334, 19
        %v446 = vpop.permute.xlu0 %445
        %447 = vrot.lane.b32.xlu0 %v342, 19
        %v448 = vpop.permute.xlu0 %447
        %449 = vrot.lane.b32.xlu0 %v343, 19
        %v450 = vpop.permute.xlu0 %449
        %451 = vrot.lane.b32.xlu0 %v344, 19
        %v452 = vpop.permute.xlu0 %451
        %453 = vrot.lane.b32.xlu0 %v346, 19
        %v454 = vpop.permute.xlu0 %453
        %455 = vrot.lane.b32.xlu0 %v354, 19
        %v456 = vpop.permute.xlu0 %455
        %457 = vrot.lane.b32.xlu0 %v355, 19
        %v458 = vpop.permute.xlu0 %457
        %459 = vrot.lane.b32.xlu0 %v356, 19
        %v460 = vpop.permute.xlu0 %459
        %461 = vrot.lane.b32.xlu0 %v358, 19
        %v462 = vpop.permute.xlu0 %461
        %463 = vrot.lane.b32.xlu0 %v366, 19
        %v464 = vpop.permute.xlu0 %463
        %465 = vrot.lane.b32.xlu0 %v367, 19
        %v466 = vpop.permute.xlu0 %465
        %467 = vrot.lane.b32.xlu0 %v368, 19
        %v468 = vpop.permute.xlu0 %467
        %vm469 = vcmask 154624
        %v470 = vsel %vm469, %v398, %v400
        %v471 = vsel %vm469, %v400, %v402
        %v472 = vsel %vm469, %v402, %v404
        %v473 = vsel %vm469, %v406, %v408
        %v474 = vsel %vm469, %v408, %v410
        %v475 = vsel %vm469, %v410, %v412
        %v476 = vsel %vm469, %v414, %v416
        %v477 = vsel %vm469, %v416, %v418
        %v478 = vsel %vm469, %v418, %v420
        %v479 = vsel %vm469, %v422, %v424
        %v480 = vsel %vm469, %v424, %v426
        %v481 = vsel %vm469, %v426, %v428
        %v482 = vsel %vm469, %v430, %v432
        %v483 = vsel %vm469, %v432, %v434
        %v484 = vsel %vm469, %v434, %v436
        %v485 = vsel %vm469, %v438, %v440
        %v486 = vsel %vm469, %v440, %v442
        %v487 = vsel %vm469, %v442, %v444
        %v488 = vsel %vm469, %v446, %v448
        %v489 = vsel %vm469, %v448, %v450
        %v490 = vsel %vm469, %v450, %v452
        %v491 = vsel %vm469, %v454, %v456
        %v492 = vsel %vm469, %v456, %v458
        %v493 = vsel %vm469, %v458, %v460
        %v494 = vsel %vm469, %v462, %v464
        %v495 = vsel %vm469, %v464, %v466
        %v496 = vsel %vm469, %v466, %v468
        %vm524 = vcmask 588800
        %v526 = vsel %vm524, %v369, 0
        %v529 = vsel %vm524, %v370, 0
        %v532 = vsel %vm524, %v371, 0
        %v535 = vsel %vm524, %v372, 0
        %537 = vmatprep.subr.mxu0 0.0
        %538 = vmatpush1.msra.mxu0 0.0
        %539 = vmatprep.subr.mxu0 0.0
        %540 = vmatpush1.msra.mxu0 0.0
        %541 = vmatprep.subr.mxu0 0.0
        %542 = vmatpush1.msra.mxu0 0.0
        %543 = vmatprep.subr.mxu0 0.0
        %544 = vmatpush1.msra.mxu0 0.0
        %545 = vmatprep.subr.mxu0 0.0
        %546 = vmatpush1.msra.mxu0 0.0
        %547 = vmatprep.subr.mxu0 0.0
        %548 = vmatpush1.msra.mxu0 0.0
        %549 = vmatprep.subr.mxu0 0.0
        %550 = vmatpush1.msra.mxu0 0.0
        %551 = vmatprep.subr.mxu0 %v495
        %552 = vmatpush1.msra.mxu0 %v494
        %553 = vmatprep.subr.mxu0 %v492
        %554 = vmatpush1.msra.mxu0 %v491
        %555 = vmatprep.subr.mxu0 %v489
        %556 = vmatpush1.msra.mxu0 %v488
        %557 = vmatprep.subr.mxu0 %v486
        %558 = vmatpush1.msra.mxu0 %v485
        %559 = vmatprep.subr.mxu0 %v483
        %560 = vmatpush1.msra.mxu0 %v482
        %561 = vmatprep.subr.mxu0 %v480
        %562 = vmatpush1.msra.mxu0 %v479
        %563 = vmatprep.subr.mxu0 %v477
        %564 = vmatpush1.msra.mxu0 %v476
        %565 = vmatprep.subr.mxu0 %v474
        %566 = vmatpush1.msra.mxu0 %v473
        %567 = vmatprep.subr.mxu0 %v471
        %568 = vmatpush1.msra.mxu0 %v470
        %569 = vmatprep.subr.mxu0 0.0
        %570 = vmatpush2.msra.mxu0 0.0
        %571 = vmatprep.subr.mxu0 0.0
        %572 = vmatpush2.msra.mxu0 0.0
        %573 = vmatprep.subr.mxu0 0.0
        %574 = vmatpush2.msra.mxu0 0.0
        %575 = vmatprep.subr.mxu0 0.0
        %576 = vmatpush2.msra.mxu0 0.0
        %577 = vmatprep.subr.mxu0 0.0
        %578 = vmatpush2.msra.mxu0 0.0
        %579 = vmatprep.subr.mxu0 0.0
        %580 = vmatpush2.msra.mxu0 0.0
        %581 = vmatprep.subr.mxu0 0.0
        %582 = vmatpush2.msra.mxu0 0.0
        %583 = vmatprep.subr.mxu0 0.0
        %584 = vmatpush2.msra.mxu0 0.0
        %585 = vmatprep.subr.mxu0 0.0
        %586 = vmatpush2.msra.mxu0 0.0
        %587 = vmatprep.subr.mxu0 0.0
        %588 = vmatpush2.msra.mxu0 0.0
        %589 = vmatprep.subr.mxu0 0.0
        %590 = vmatpush2.msra.mxu0 0.0
        %591 = vmatprep.subr.mxu0 0.0
        %592 = vmatpush2.msra.mxu0 0.0
        %593 = vmatprep.subr.mxu0 0.0
        %594 = vmatpush2.msra.mxu0 0.0
        %595 = vmatprep.subr.mxu0 0.0
        %596 = vmatpush2.msra.mxu0 0.0
        %597 = vmatprep.subr.mxu0 0.0
        %598 = vmatpush2.msra.mxu0 0.0
        %599 = vmatprep.subr.mxu0 0.0
        %600 = vmatpush2.msra.mxu0 0.0
        %601 = vmatprep.mubr.f32.mxu0 0.0
        %602 = vmatmul.mubr.f32.gmra.mxu0 %v526
        %v603 = vpop.f32.mrf.mxu0
        %v604 = vadd.f32 %v380, %v603
        %v605 = vpop.f32.mrf.mxu0
        %v606 = vadd.f32 %v380, %v605
        %607 = vmatprep.mubr.f32.mxu0 0.0
        %608 = vmatmul.mubr.f32.gmra.mxu0 %v529
        %v609 = vpop.f32.mrf.mxu0
        %v610 = vadd.f32 %v385, %v609
        %v611 = vpop.f32.mrf.mxu0
        %v612 = vadd.f32 %v385, %v611
        %613 = vmatprep.mubr.f32.mxu0 0.0
        %614 = vmatmul.mubr.f32.gmra.mxu0 %v532
        %v615 = vpop.f32.mrf.mxu0
        %v616 = vadd.f32 %v390, %v615
        %v617 = vpop.f32.mrf.mxu0
        %v618 = vadd.f32 %v390, %v617
        %619 = vmatprep.mubr.f32.mxu0 0.0
        %620 = vmatmul.mubr.f32.gmra.mxu0 %v535
        %v621 = vpop.f32.mrf.mxu0
        %v622 = vadd.f32 %v395, %v621
        %v623 = vpop.f32.mrf.mxu0
        %v624 = vadd.f32 %v395, %v623
        %625 = vdwg.mxu0
        %626 = vmatprep.subr.mxu0 0.0
        %627 = vmatpush1.msra.mxu0 0.0
        %628 = vmatprep.subr.mxu0 0.0
        %629 = vmatpush1.msra.mxu0 0.0
        %630 = vmatprep.subr.mxu0 0.0
        %631 = vmatpush1.msra.mxu0 0.0
        %632 = vmatprep.subr.mxu0 0.0
        %633 = vmatpush1.msra.mxu0 0.0
        %634 = vmatprep.subr.mxu0 0.0
        %635 = vmatpush1.msra.mxu0 0.0
        %636 = vmatprep.subr.mxu0 0.0
        %637 = vmatpush1.msra.mxu0 0.0
        %638 = vmatprep.subr.mxu0 0.0
        %639 = vmatpush1.msra.mxu0 0.0
        %640 = vmatprep.subr.mxu0 0.0
        %641 = vmatpush1.msra.mxu0 %v496
        %642 = vmatprep.subr.mxu0 0.0
        %643 = vmatpush1.msra.mxu0 %v493
        %644 = vmatprep.subr.mxu0 0.0
        %645 = vmatpush1.msra.mxu0 %v490
        %646 = vmatprep.subr.mxu0 0.0
        %647 = vmatpush1.msra.mxu0 %v487
        %648 = vmatprep.subr.mxu0 0.0
        %649 = vmatpush1.msra.mxu0 %v484
        %650 = vmatprep.subr.mxu0 0.0
        %651 = vmatpush1.msra.mxu0 %v481
        %652 = vmatprep.subr.mxu0 0.0
        %653 = vmatpush1.msra.mxu0 %v478
        %654 = vmatprep.subr.mxu0 0.0
        %655 = vmatpush1.msra.mxu0 %v475
        %656 = vmatprep.subr.mxu0 0.0
        %657 = vmatpush1.msra.mxu0 %v472
        %658 = vmatprep.subr.mxu0 0.0
        %659 = vmatpush2.msra.mxu0 0.0
        %660 = vmatprep.subr.mxu0 0.0
        %661 = vmatpush2.msra.mxu0 0.0
        %662 = vmatprep.subr.mxu0 0.0
        %663 = vmatpush2.msra.mxu0 0.0
        %664 = vmatprep.subr.mxu0 0.0
        %665 = vmatpush2.msra.mxu0 0.0
        %666 = vmatprep.subr.mxu0 0.0
        %667 = vmatpush2.msra.mxu0 0.0
        %668 = vmatprep.subr.mxu0 0.0
        %669 = vmatpush2.msra.mxu0 0.0
        %670 = vmatprep.subr.mxu0 0.0
        %671 = vmatpush2.msra.mxu0 0.0
        %672 = vmatprep.subr.mxu0 0.0
        %673 = vmatpush2.msra.mxu0 0.0
        %674 = vmatprep.subr.mxu0 0.0
        %675 = vmatpush2.msra.mxu0 0.0
        %676 = vmatprep.subr.mxu0 0.0
        %677 = vmatpush2.msra.mxu0 0.0
        %678 = vmatprep.subr.mxu0 0.0
        %679 = vmatpush2.msra.mxu0 0.0
        %680 = vmatprep.subr.mxu0 0.0
        %681 = vmatpush2.msra.mxu0 0.0
        %682 = vmatprep.subr.mxu0 0.0
        %683 = vmatpush2.msra.mxu0 0.0
        %684 = vmatprep.subr.mxu0 0.0
        %685 = vmatpush2.msra.mxu0 0.0
        %686 = vmatprep.subr.mxu0 0.0
        %687 = vmatpush2.msra.mxu0 0.0
        %688 = vmatprep.subr.mxu0 0.0
        %689 = vmatpush2.msra.mxu0 0.0
        %690 = vmatprep.mubr.f32.mxu0 0.0
        %691 = vmatmul.mubr.f32.gmra.mxu0 %v526
        %v692 = vpop.f32.mrf.mxu0
        %v693 = vadd.f32 %v380, %v692
        %v694 = vpop.f32.mrf.mxu0
        %695 = vmatprep.mubr.f32.mxu0 0.0
        %696 = vmatmul.mubr.f32.gmra.mxu0 %v529
        %v697 = vpop.f32.mrf.mxu0
        %v698 = vadd.f32 %v385, %v697
        %v699 = vpop.f32.mrf.mxu0
        %700 = vmatprep.mubr.f32.mxu0 0.0
        %701 = vmatmul.mubr.f32.gmra.mxu0 %v532
        %v702 = vpop.f32.mrf.mxu0
        %v703 = vadd.f32 %v390, %v702
        %v704 = vpop.f32.mrf.mxu0
        %705 = vmatprep.mubr.f32.mxu0 0.0
        %706 = vmatmul.mubr.f32.gmra.mxu0 %v535
        %v707 = vpop.f32.mrf.mxu0
        %v708 = vadd.f32 %v395, %v707
        %v709 = vpop.f32.mrf.mxu0
        %710 = vdwg.mxu0
        %vm711 = vcmp.gt.f32.partialorder %v604, 0.0
        %vm712 = vcmp.gt.f32.partialorder %v606, 0.0
        %vm713 = vcmp.gt.f32.partialorder %v693, 0.0
        %vm714 = vcmp.gt.f32.partialorder %v610, 0.0
        %vm715 = vcmp.gt.f32.partialorder %v612, 0.0
        %vm716 = vcmp.gt.f32.partialorder %v698, 0.0
        %vm717 = vcmp.gt.f32.partialorder %v616, 0.0
        %vm718 = vcmp.gt.f32.partialorder %v618, 0.0
        %vm719 = vcmp.gt.f32.partialorder %v703, 0.0
        %vm720 = vcmp.gt.f32.partialorder %v622, 0.0
        %vm721 = vcmp.gt.f32.partialorder %v624, 0.0
        %vm722 = vcmp.gt.f32.partialorder %v708, 0.0
        %v723 = vmul.f32 %v604, 0.2
        %v724 = vmul.f32 %v606, 0.2
        %v725 = vmul.f32 %v693, 0.2
        %v726 = vmul.f32 %v610, 0.2
        %v727 = vmul.f32 %v612, 0.2
        %v728 = vmul.f32 %v698, 0.2
        %v729 = vmul.f32 %v616, 0.2
        %v730 = vmul.f32 %v618, 0.2
        %v731 = vmul.f32 %v703, 0.2
        %v732 = vmul.f32 %v622, 0.2
        %v733 = vmul.f32 %v624, 0.2
        %v734 = vmul.f32 %v708, 0.2
        %v735 = vsel %vm711, %v604, %v723
        %v736 = vsel %vm712, %v606, %v724
        %v737 = vsel %vm713, %v693, %v725
        %v738 = vsel %vm714, %v610, %v726
        %v739 = vsel %vm715, %v612, %v727
        %v740 = vsel %vm716, %v698, %v728
        %v741 = vsel %vm717, %v616, %v729
        %v742 = vsel %vm718, %v618, %v730
        %v743 = vsel %vm719, %v703, %v731
        %v744 = vsel %vm720, %v622, %v732
        %v745 = vsel %vm721, %v624, %v733
        %v746 = vsel %vm722, %v708, %v734
        %v747 = vld [vmem:[%s5] sm:$0x7]
        %v749 = vlaneseq
        %v750 = vshrl.u32 %v749, 7
        %v751 = vsub.s32 0, %v750
        %v752 = vrot.slane %v747, %v751
        %v753 = vlaneseq
        %v754 = vshrl.u32 %v753, 7
        %v755 = vsub.s32 1, %v754
        %v756 = vrot.slane %v747, %v755
        %v757 = vlaneseq
        %v758 = vshrl.u32 %v757, 7
        %v759 = vsub.s32 2, %v758
        %v760 = vrot.slane %v747, %v759
        %v764 = vmul.f32 %v735, %v752
        %v765 = vmul.f32 %v736, %v756
        %v766 = vmul.f32 %v737, %v760
        %v767 = vmul.f32 %v738, %v752
        %v768 = vmul.f32 %v739, %v756
        %v769 = vmul.f32 %v740, %v760
        %v770 = vmul.f32 %v741, %v752
        %v771 = vmul.f32 %v742, %v756
        %v772 = vmul.f32 %v743, %v760
        %v773 = vmul.f32 %v744, %v752
        %v774 = vmul.f32 %v745, %v756
        %v775 = vmul.f32 %v746, %v760
        %v776 = vpack.c.bf16 %v767, %v764
        %v777 = vpack.c.bf16 %v768, %v765
        %v778 = vpack.c.bf16 %v769, %v766
        %v779 = vpack.c.bf16 %v773, %v770
        %v780 = vpack.c.bf16 %v774, %v771
        %v781 = vpack.c.bf16 %v775, %v772
        %789 = vrot.lane.b32.xlu0 0, 127
        %v790 = vpop.permute.xlu0 %789
        %791 = vrot.lane.b32.xlu0 %v776, 127
        %v792 = vpop.permute.xlu0 %791
        %793 = vrot.lane.b32.xlu0 %v777, 127
        %v794 = vpop.permute.xlu0 %793
        %795 = vrot.lane.b32.xlu0 %v778, 127
        %v796 = vpop.permute.xlu0 %795
        %797 = vrot.lane.b32.xlu0 %v779, 127
        %v798 = vpop.permute.xlu0 %797
        %799 = vrot.lane.b32.xlu0 %v780, 127
        %v800 = vpop.permute.xlu0 %799
        %801 = vrot.lane.b32.xlu0 %v781, 127
        %v802 = vpop.permute.xlu0 %801
        %vm803 = vcmask 1039360
        %v804 = vsel %vm803, %v790, %v792
        %v805 = vsel %vm803, %v792, %v794
        %v806 = vsel %vm803, %v794, %v796
        %v807 = vsel %vm803, %v790, %v798
        %v808 = vsel %vm803, %v798, %v800
        %v809 = vsel %vm803, %v800, %v802
        %810 = vrot.lane.b32.xlu0 0, 126
        %v811 = vpop.permute.xlu0 %810
        %812 = vrot.lane.b32.xlu0 %v776, 126
        %v813 = vpop.permute.xlu0 %812
        %814 = vrot.lane.b32.xlu0 %v777, 126
        %v815 = vpop.permute.xlu0 %814
        %816 = vrot.lane.b32.xlu0 %v778, 126
        %v817 = vpop.permute.xlu0 %816
        %818 = vrot.lane.b32.xlu0 %v779, 126
        %v819 = vpop.permute.xlu0 %818
        %820 = vrot.lane.b32.xlu0 %v780, 126
        %v821 = vpop.permute.xlu0 %820
        %822 = vrot.lane.b32.xlu0 %v781, 126
        %v823 = vpop.permute.xlu0 %822
        %vm824 = vcmask 1031168
        %v825 = vsel %vm824, %v811, %v813
        %v826 = vsel %vm824, %v813, %v815
        %v827 = vsel %vm824, %v815, %v817
        %v828 = vsel %vm824, %v811, %v819
        %v829 = vsel %vm824, %v819, %v821
        %v830 = vsel %vm824, %v821, %v823
        %831 = vrot.lane.b32.xlu0 0, 110
        %v832 = vpop.permute.xlu0 %831
        %833 = vrot.lane.b32.xlu0 %v776, 110
        %v834 = vpop.permute.xlu0 %833
        %835 = vrot.lane.b32.xlu0 %v777, 110
        %v836 = vpop.permute.xlu0 %835
        %837 = vrot.lane.b32.xlu0 %v778, 110
        %v838 = vpop.permute.xlu0 %837
        %839 = vrot.lane.b32.xlu0 %v779, 110
        %v840 = vpop.permute.xlu0 %839
        %841 = vrot.lane.b32.xlu0 %v780, 110
        %v842 = vpop.permute.xlu0 %841
        %843 = vrot.lane.b32.xlu0 %v781, 110
        %v844 = vpop.permute.xlu0 %843
        %vm845 = vcmask 900096
        %v846 = vsel %vm845, %v832, %v834
        %v847 = vsel %vm845, %v834, %v836
        %v848 = vsel %vm845, %v836, %v838
        %v849 = vsel %vm845, %v832, %v840
        %v850 = vsel %vm845, %v840, %v842
        %v851 = vsel %vm845, %v842, %v844
        %852 = vrot.lane.b32.xlu0 %v776, 109
        %v853 = vpop.permute.xlu0 %852
        %854 = vrot.lane.b32.xlu0 %v777, 109
        %v855 = vpop.permute.xlu0 %854
        %856 = vrot.lane.b32.xlu0 %v778, 109
        %v857 = vpop.permute.xlu0 %856
        %858 = vrot.lane.b32.xlu0 %v779, 109
        %v859 = vpop.permute.xlu0 %858
        %860 = vrot.lane.b32.xlu0 %v780, 109
        %v861 = vpop.permute.xlu0 %860
        %862 = vrot.lane.b32.xlu0 %v781, 109
        %v863 = vpop.permute.xlu0 %862
        %vm864 = vcmask 891904
        %v865 = vsel %vm864, %v853, %v855
        %v866 = vsel %vm864, %v855, %v857
        %v867 = vsel %vm864, %v859, %v861
        %v868 = vsel %vm864, %v861, %v863
        %869 = vrot.lane.b32.xlu0 %v776, 108
        %v870 = vpop.permute.xlu0 %869
        %871 = vrot.lane.b32.xlu0 %v777, 108
        %v872 = vpop.permute.xlu0 %871
        %873 = vrot.lane.b32.xlu0 %v778, 108
        %v874 = vpop.permute.xlu0 %873
        %875 = vrot.lane.b32.xlu0 0, 108
        %v876 = vpop.permute.xlu0 %875
        %877 = vrot.lane.b32.xlu0 %v779, 108
        %v878 = vpop.permute.xlu0 %877
        %879 = vrot.lane.b32.xlu0 %v780, 108
        %v880 = vpop.permute.xlu0 %879
        %881 = vrot.lane.b32.xlu0 %v781, 108
        %v882 = vpop.permute.xlu0 %881
        %vm883 = vcmask 883712
        %v884 = vsel %vm883, %v870, %v872
        %v885 = vsel %vm883, %v872, %v874
        %v886 = vsel %vm883, %v874, %v876
        %v887 = vsel %vm883, %v878, %v880
        %v888 = vsel %vm883, %v880, %v882
        %v889 = vsel %vm883, %v882, %v876
        %890 = vrot.lane.b32.xlu0 %v776, 92
        %v891 = vpop.permute.xlu0 %890
        %892 = vrot.lane.b32.xlu0 %v777, 92
        %v893 = vpop.permute.xlu0 %892
        %894 = vrot.lane.b32.xlu0 %v778, 92
        %v895 = vpop.permute.xlu0 %894
        %896 = vrot.lane.b32.xlu0 0, 92
        %v897 = vpop.permute.xlu0 %896
        %898 = vrot.lane.b32.xlu0 %v779, 92
        %v899 = vpop.permute.xlu0 %898
        %900 = vrot.lane.b32.xlu0 %v780, 92
        %v901 = vpop.permute.xlu0 %900
        %902 = vrot.lane.b32.xlu0 %v781, 92
        %v903 = vpop.permute.xlu0 %902
        %vm904 = vcmask 752640
        %v905 = vsel %vm904, %v891, %v893
        %v906 = vsel %vm904, %v893, %v895
        %v907 = vsel %vm904, %v895, %v897
        %v908 = vsel %vm904, %v899, %v901
        %v909 = vsel %vm904, %v901, %v903
        %v910 = vsel %vm904, %v903, %v897
        %911 = vrot.lane.b32.xlu0 %v776, 91
        %v912 = vpop.permute.xlu0 %911
        %913 = vrot.lane.b32.xlu0 %v777, 91
        %v914 = vpop.permute.xlu0 %913
        %915 = vrot.lane.b32.xlu0 %v778, 91
        %v916 = vpop.permute.xlu0 %915
        %917 = vrot.lane.b32.xlu0 0, 91
        %v918 = vpop.permute.xlu0 %917
        %919 = vrot.lane.b32.xlu0 %v779, 91
        %v920 = vpop.permute.xlu0 %919
        %921 = vrot.lane.b32.xlu0 %v780, 91
        %v922 = vpop.permute.xlu0 %921
        %923 = vrot.lane.b32.xlu0 %v781, 91
        %v924 = vpop.permute.xlu0 %923
        %vm925 = vcmask 744448
        %v926 = vsel %vm925, %v912, %v914
        %v927 = vsel %vm925, %v914, %v916
        %v928 = vsel %vm925, %v916, %v918
        %v929 = vsel %vm925, %v920, %v922
        %v930 = vsel %vm925, %v922, %v924
        %v931 = vsel %vm925, %v924, %v918
        %932 = vrot.lane.b32.xlu0 %v776, 90
        %v933 = vpop.permute.xlu0 %932
        %934 = vrot.lane.b32.xlu0 %v777, 90
        %v935 = vpop.permute.xlu0 %934
        %936 = vrot.lane.b32.xlu0 %v778, 90
        %v937 = vpop.permute.xlu0 %936
        %938 = vrot.lane.b32.xlu0 0, 90
        %v939 = vpop.permute.xlu0 %938
        %940 = vrot.lane.b32.xlu0 %v779, 90
        %v941 = vpop.permute.xlu0 %940
        %942 = vrot.lane.b32.xlu0 %v780, 90
        %v943 = vpop.permute.xlu0 %942
        %944 = vrot.lane.b32.xlu0 %v781, 90
        %v945 = vpop.permute.xlu0 %944
        %vm946 = vcmask 736256
        %v947 = vsel %vm946, %v933, %v935
        %v948 = vsel %vm946, %v935, %v937
        %v949 = vsel %vm946, %v937, %v939
        %v950 = vsel %vm946, %v941, %v943
        %v951 = vsel %vm946, %v943, %v945
        %v952 = vsel %vm946, %v945, %v939
        %v953 = vld [vmem:[%s3] sm:$0xff]
        %v954 = vld [vmem:[%s3 + $0x8] sm:$0xf]
        %v955 = vld [vmem:[%s4] sm:$0xff]
        %957 = vset.pattern.permute.xlu0 0
        %958 = vperm.xlu0 %957, %v955
        %v959 = vpop.permute.xlu0 %958
        %v963 = vunpack.c.l.b16 %v953
        %v964 = vunpack.c.h.b16 %v953
        %v965 = vunpack.c.l.b16 %v954
        %v966 = vpack.c.b16 %v963, %v963
        %v967 = vpack.c.b16 %v964, %v964
        %v968 = vpack.c.b16 %v965, %v965
        %971 = vrot.lane.b32.xlu0 0, 19
        %v972 = vpop.permute.xlu0 %971
        %973 = vrot.lane.b32.xlu0 %v776, 19
        %v974 = vpop.permute.xlu0 %973
        %975 = vrot.lane.b32.xlu0 %v777, 19
        %v976 = vpop.permute.xlu0 %975
        %977 = vrot.lane.b32.xlu0 %v778, 19
        %v978 = vpop.permute.xlu0 %977
        %979 = vrot.lane.b32.xlu0 %v779, 19
        %v980 = vpop.permute.xlu0 %979
        %981 = vrot.lane.b32.xlu0 %v780, 19
        %v982 = vpop.permute.xlu0 %981
        %983 = vrot.lane.b32.xlu0 %v781, 19
        %v984 = vpop.permute.xlu0 %983
        %985 = vrot.lane.b32.xlu0 %v804, 19
        %v986 = vpop.permute.xlu0 %985
        %987 = vrot.lane.b32.xlu0 %v805, 19
        %v988 = vpop.permute.xlu0 %987
        %989 = vrot.lane.b32.xlu0 %v806, 19
        %v990 = vpop.permute.xlu0 %989
        %991 = vrot.lane.b32.xlu0 %v796, 19
        %v992 = vpop.permute.xlu0 %991
        %993 = vrot.lane.b32.xlu0 %v807, 19
        %v994 = vpop.permute.xlu0 %993
        %995 = vrot.lane.b32.xlu0 %v808, 19
        %v996 = vpop.permute.xlu0 %995
        %997 = vrot.lane.b32.xlu0 %v809, 19
        %v998 = vpop.permute.xlu0 %997
        %999 = vrot.lane.b32.xlu0 %v802, 19
        %v1000 = vpop.permute.xlu0 %999
        %1001 = vrot.lane.b32.xlu0 %v825, 19
        %v1002 = vpop.permute.xlu0 %1001
        %1003 = vrot.lane.b32.xlu0 %v826, 19
        %v1004 = vpop.permute.xlu0 %1003
        %1005 = vrot.lane.b32.xlu0 %v827, 19
        %v1006 = vpop.permute.xlu0 %1005
        %1007 = vrot.lane.b32.xlu0 %v817, 19
        %v1008 = vpop.permute.xlu0 %1007
        %1009 = vrot.lane.b32.xlu0 %v828, 19
        %v1010 = vpop.permute.xlu0 %1009
        %1011 = vrot.lane.b32.xlu0 %v829, 19
        %v1012 = vpop.permute.xlu0 %1011
        %1013 = vrot.lane.b32.xlu0 %v830, 19
        %v1014 = vpop.permute.xlu0 %1013
        %1015 = vrot.lane.b32.xlu0 %v823, 19
        %v1016 = vpop.permute.xlu0 %1015
        %1017 = vrot.lane.b32.xlu0 %v846, 19
        %v1018 = vpop.permute.xlu0 %1017
        %1019 = vrot.lane.b32.xlu0 %v847, 19
        %v1020 = vpop.permute.xlu0 %1019
        %1021 = vrot.lane.b32.xlu0 %v848, 19
        %v1022 = vpop.permute.xlu0 %1021
        %1023 = vrot.lane.b32.xlu0 %v838, 19
        %v1024 = vpop.permute.xlu0 %1023
        %1025 = vrot.lane.b32.xlu0 %v849, 19
        %v1026 = vpop.permute.xlu0 %1025
        %1027 = vrot.lane.b32.xlu0 %v850, 19
        %v1028 = vpop.permute.xlu0 %1027
        %1029 = vrot.lane.b32.xlu0 %v851, 19
        %v1030 = vpop.permute.xlu0 %1029
        %1031 = vrot.lane.b32.xlu0 %v844, 19
        %v1032 = vpop.permute.xlu0 %1031
        %1033 = vrot.lane.b32.xlu0 %v853, 19
        %v1034 = vpop.permute.xlu0 %1033
        %1035 = vrot.lane.b32.xlu0 %v865, 19
        %v1036 = vpop.permute.xlu0 %1035
        %1037 = vrot.lane.b32.xlu0 %v866, 19
        %v1038 = vpop.permute.xlu0 %1037
        %1039 = vrot.lane.b32.xlu0 %v857, 19
        %v1040 = vpop.permute.xlu0 %1039
        %1041 = vrot.lane.b32.xlu0 %v859, 19
        %v1042 = vpop.permute.xlu0 %1041
        %1043 = vrot.lane.b32.xlu0 %v867, 19
        %v1044 = vpop.permute.xlu0 %1043
        %1045 = vrot.lane.b32.xlu0 %v868, 19
        %v1046 = vpop.permute.xlu0 %1045
        %1047 = vrot.lane.b32.xlu0 %v863, 19
        %v1048 = vpop.permute.xlu0 %1047
        %1049 = vrot.lane.b32.xlu0 %v870, 19
        %v1050 = vpop.permute.xlu0 %1049
        %1051 = vrot.lane.b32.xlu0 %v884, 19
        %v1052 = vpop.permute.xlu0 %1051
        %1053 = vrot.lane.b32.xlu0 %v885, 19
        %v1054 = vpop.permute.xlu0 %1053
        %1055 = vrot.lane.b32.xlu0 %v886, 19
        %v1056 = vpop.permute.xlu0 %1055
        %1057 = vrot.lane.b32.xlu0 %v878, 19
        %v1058 = vpop.permute.xlu0 %1057
        %1059 = vrot.lane.b32.xlu0 %v887, 19
        %v1060 = vpop.permute.xlu0 %1059
        %1061 = vrot.lane.b32.xlu0 %v888, 19
        %v1062 = vpop.permute.xlu0 %1061
        %1063 = vrot.lane.b32.xlu0 %v889, 19
        %v1064 = vpop.permute.xlu0 %1063
        %1065 = vrot.lane.b32.xlu0 %v891, 19
        %v1066 = vpop.permute.xlu0 %1065
        %1067 = vrot.lane.b32.xlu0 %v905, 19
        %v1068 = vpop.permute.xlu0 %1067
        %1069 = vrot.lane.b32.xlu0 %v906, 19
        %v1070 = vpop.permute.xlu0 %1069
        %1071 = vrot.lane.b32.xlu0 %v907, 19
        %v1072 = vpop.permute.xlu0 %1071
        %1073 = vrot.lane.b32.xlu0 %v899, 19
        %v1074 = vpop.permute.xlu0 %1073
        %1075 = vrot.lane.b32.xlu0 %v908, 19
        %v1076 = vpop.permute.xlu0 %1075
        %1077 = vrot.lane.b32.xlu0 %v909, 19
        %v1078 = vpop.permute.xlu0 %1077
        %1079 = vrot.lane.b32.xlu0 %v910, 19
        %v1080 = vpop.permute.xlu0 %1079
        %1081 = vrot.lane.b32.xlu0 %v912, 19
        %v1082 = vpop.permute.xlu0 %1081
        %1083 = vrot.lane.b32.xlu0 %v926, 19
        %v1084 = vpop.permute.xlu0 %1083
        %1085 = vrot.lane.b32.xlu0 %v927, 19
        %v1086 = vpop.permute.xlu0 %1085
        %1087 = vrot.lane.b32.xlu0 %v928, 19
        %v1088 = vpop.permute.xlu0 %1087
        %1089 = vrot.lane.b32.xlu0 %v920, 19
        %v1090 = vpop.permute.xlu0 %1089
        %1091 = vrot.lane.b32.xlu0 %v929, 19
        %v1092 = vpop.permute.xlu0 %1091
        %1093 = vrot.lane.b32.xlu0 %v930, 19
        %v1094 = vpop.permute.xlu0 %1093
        %1095 = vrot.lane.b32.xlu0 %v931, 19
        %v1096 = vpop.permute.xlu0 %1095
        %1097 = vrot.lane.b32.xlu0 %v933, 19
        %v1098 = vpop.permute.xlu0 %1097
        %1099 = vrot.lane.b32.xlu0 %v947, 19
        %v1100 = vpop.permute.xlu0 %1099
        %1101 = vrot.lane.b32.xlu0 %v948, 19
        %v1102 = vpop.permute.xlu0 %1101
        %1103 = vrot.lane.b32.xlu0 %v949, 19
        %v1104 = vpop.permute.xlu0 %1103
        %1105 = vrot.lane.b32.xlu0 %v941, 19
        %v1106 = vpop.permute.xlu0 %1105
        %1107 = vrot.lane.b32.xlu0 %v950, 19
        %v1108 = vpop.permute.xlu0 %1107
        %1109 = vrot.lane.b32.xlu0 %v951, 19
        %v1110 = vpop.permute.xlu0 %1109
        %1111 = vrot.lane.b32.xlu0 %v952, 19
        %v1112 = vpop.permute.xlu0 %1111
        %vm1113 = vcmask 154624
        %v1114 = vsel %vm1113, %v972, %v974
        %v1115 = vsel %vm1113, %v974, %v976
        %v1116 = vsel %vm1113, %v976, %v978
        %v1117 = vsel %vm1113, %v972, %v980
        %v1118 = vsel %vm1113, %v980, %v982
        %v1119 = vsel %vm1113, %v982, %v984
        %v1120 = vsel %vm1113, %v986, %v988
        %v1121 = vsel %vm1113, %v988, %v990
        %v1122 = vsel %vm1113, %v990, %v992
        %v1123 = vsel %vm1113, %v994, %v996
        %v1124 = vsel %vm1113, %v996, %v998
        %v1125 = vsel %vm1113, %v998, %v1000
        %v1126 = vsel %vm1113, %v1002, %v1004
        %v1127 = vsel %vm1113, %v1004, %v1006
        %v1128 = vsel %vm1113, %v1006, %v1008
        %v1129 = vsel %vm1113, %v1010, %v1012
        %v1130 = vsel %vm1113, %v1012, %v1014
        %v1131 = vsel %vm1113, %v1014, %v1016
        %v1132 = vsel %vm1113, %v1018, %v1020
        %v1133 = vsel %vm1113, %v1020, %v1022
        %v1134 = vsel %vm1113, %v1022, %v1024
        %v1135 = vsel %vm1113, %v1026, %v1028
        %v1136 = vsel %vm1113, %v1028, %v1030
        %v1137 = vsel %vm1113, %v1030, %v1032
        %v1138 = vsel %vm1113, %v1034, %v1036
        %v1139 = vsel %vm1113, %v1036, %v1038
        %v1140 = vsel %vm1113, %v1038, %v1040
        %v1141 = vsel %vm1113, %v1042, %v1044
        %v1142 = vsel %vm1113, %v1044, %v1046
        %v1143 = vsel %vm1113, %v1046, %v1048
        %v1144 = vsel %vm1113, %v1050, %v1052
        %v1145 = vsel %vm1113, %v1052, %v1054
        %v1146 = vsel %vm1113, %v1054, %v1056
        %v1147 = vsel %vm1113, %v1058, %v1060
        %v1148 = vsel %vm1113, %v1060, %v1062
        %v1149 = vsel %vm1113, %v1062, %v1064
        %v1150 = vsel %vm1113, %v1066, %v1068
        %v1151 = vsel %vm1113, %v1068, %v1070
        %v1152 = vsel %vm1113, %v1070, %v1072
        %v1153 = vsel %vm1113, %v1074, %v1076
        %v1154 = vsel %vm1113, %v1076, %v1078
        %v1155 = vsel %vm1113, %v1078, %v1080
        %v1156 = vsel %vm1113, %v1082, %v1084
        %v1157 = vsel %vm1113, %v1084, %v1086
        %v1158 = vsel %vm1113, %v1086, %v1088
        %v1159 = vsel %vm1113, %v1090, %v1092
        %v1160 = vsel %vm1113, %v1092, %v1094
        %v1161 = vsel %vm1113, %v1094, %v1096
        %v1162 = vsel %vm1113, %v1098, %v1100
        %v1163 = vsel %vm1113, %v1100, %v1102
        %v1164 = vsel %vm1113, %v1102, %v1104
        %v1165 = vsel %vm1113, %v1106, %v1108
        %v1166 = vsel %vm1113, %v1108, %v1110
        %v1167 = vsel %vm1113, %v1110, %v1112
        %vm1222 = vcmask 261120
        %v1224 = vsel %vm1222, %v968, 0
        %1226 = vmatprep.subr.bf16.mxu0 %v1136
        %1227 = vmatpush1.bf16.msra.mxu0 %v1135
        %1228 = vmatprep.subr.bf16.mxu0 %v1133
        %1229 = vmatpush1.bf16.msra.mxu0 %v1132
        %1230 = vmatprep.subr.bf16.mxu0 %v1130
        %1231 = vmatpush1.bf16.msra.mxu0 %v1129
        %1232 = vmatprep.subr.bf16.mxu0 %v1127
        %1233 = vmatpush1.bf16.msra.mxu0 %v1126
        %1234 = vmatprep.subr.bf16.mxu0 %v1124
        %1235 = vmatpush1.bf16.msra.mxu0 %v1123
        %1236 = vmatprep.subr.bf16.mxu0 %v1121
        %1237 = vmatpush1.bf16.msra.mxu0 %v1120
        %1238 = vmatprep.subr.bf16.mxu0 %v1118
        %1239 = vmatpush1.bf16.msra.mxu0 %v1117
        %1240 = vmatprep.subr.bf16.mxu0 %v1115
        %1241 = vmatpush1.bf16.msra.mxu0 %v1114
        %1242 = vmatprep.subr.bf16.mxu0 %v1160
        %1243 = vmatpush2.bf16.msra.mxu0 %v1159
        %1244 = vmatprep.subr.bf16.mxu0 %v1157
        %1245 = vmatpush2.bf16.msra.mxu0 %v1156
        %1246 = vmatprep.subr.bf16.mxu0 %v1154
        %1247 = vmatpush2.bf16.msra.mxu0 %v1153
        %1248 = vmatprep.subr.bf16.mxu0 %v1151
        %1249 = vmatpush2.bf16.msra.mxu0 %v1150
        %1250 = vmatprep.subr.bf16.mxu0 %v1148
        %1251 = vmatpush2.bf16.msra.mxu0 %v1147
        %1252 = vmatprep.subr.bf16.mxu0 %v1145
        %1253 = vmatpush2.bf16.msra.mxu0 %v1144
        %1254 = vmatprep.subr.bf16.mxu0 %v1142
        %1255 = vmatpush2.bf16.msra.mxu0 %v1141
        %1256 = vmatprep.subr.bf16.mxu0 %v1139
        %1257 = vmatpush2.bf16.msra.mxu0 %v1138
        %1258 = vmatprep.mubr.bf16.mxu0 %v967
        %1259 = vmatmul.mubr.bf16.gmra.mxu0 %v966
        %v1260 = vpop.f32.mrf.mxu0
        %v1261 = vadd.f32 %v959, %v1260
        %v1262 = vpop.f32.mrf.mxu0
        %v1263 = vadd.f32 %v959, %v1262
        %v1264 = vpop.f32.mrf.mxu0
        %v1265 = vpop.f32.mrf.mxu0
        %1266 = vdwg.mxu0
        %1267 = vmatprep.subr.bf16.mxu0 0
        %1268 = vmatpush1.bf16.msra.mxu0 0
        %1269 = vmatprep.subr.bf16.mxu0 0
        %1270 = vmatpush1.bf16.msra.mxu0 0
        %1271 = vmatprep.subr.bf16.mxu0 0
        %1272 = vmatpush1.bf16.msra.mxu0 0
        %1273 = vmatprep.subr.bf16.mxu0 0
        %1274 = vmatpush1.bf16.msra.mxu0 0
        %1275 = vmatprep.subr.bf16.mxu0 0
        %1276 = vmatpush1.bf16.msra.mxu0 0
        %1277 = vmatprep.subr.bf16.mxu0 0
        %1278 = vmatpush1.bf16.msra.mxu0 0
        %1279 = vmatprep.subr.bf16.mxu0 %v1166
        %1280 = vmatpush1.bf16.msra.mxu0 %v1165
        %1281 = vmatprep.subr.bf16.mxu0 %v1163
        %1282 = vmatpush1.bf16.msra.mxu0 %v1162
        %1283 = vmatprep.subr.bf16.mxu0 0
        %1284 = vmatpush2.bf16.msra.mxu0 0
        %1285 = vmatprep.subr.bf16.mxu0 0
        %1286 = vmatpush2.bf16.msra.mxu0 0
        %1287 = vmatprep.subr.bf16.mxu0 0
        %1288 = vmatpush2.bf16.msra.mxu0 0
        %1289 = vmatprep.subr.bf16.mxu0 0
        %1290 = vmatpush2.bf16.msra.mxu0 0
        %1291 = vmatprep.subr.bf16.mxu0 0
        %1292 = vmatpush2.bf16.msra.mxu0 0
        %1293 = vmatprep.subr.bf16.mxu0 0
        %1294 = vmatpush2.bf16.msra.mxu0 0
        %1295 = vmatprep.subr.bf16.mxu0 0
        %1296 = vmatpush2.bf16.msra.mxu0 0
        %1297 = vmatprep.subr.bf16.mxu0 0
        %1298 = vmatpush2.bf16.msra.mxu0 0
        %1299 = vmatprep.mubr.bf16.mxu0 0
        %1300 = vmatmul.mubr.bf16.gmra.mxu0 %v1224
        %v1301 = vpop.f32.mrf.mxu0
        %v1302 = vadd.f32 %v1261, %v1301
        %v1303 = vpop.f32.mrf.mxu0
        %v1304 = vadd.f32 %v1263, %v1303
        %v1305 = vpop.f32.mrf.mxu0
        %v1306 = vpop.f32.mrf.mxu0
        %1307 = vdwg.mxu0
        %1308 = vmatprep.subr.bf16.mxu0 0
        %1309 = vmatpush1.bf16.msra.mxu0 %v1137
        %1310 = vmatprep.subr.bf16.mxu0 0
        %1311 = vmatpush1.bf16.msra.mxu0 %v1134
        %1312 = vmatprep.subr.bf16.mxu0 0
        %1313 = vmatpush1.bf16.msra.mxu0 %v1131
        %1314 = vmatprep.subr.bf16.mxu0 0
        %1315 = vmatpush1.bf16.msra.mxu0 %v1128
        %1316 = vmatprep.subr.bf16.mxu0 0
        %1317 = vmatpush1.bf16.msra.mxu0 %v1125
        %1318 = vmatprep.subr.bf16.mxu0 0
        %1319 = vmatpush1.bf16.msra.mxu0 %v1122
        %1320 = vmatprep.subr.bf16.mxu0 0
        %1321 = vmatpush1.bf16.msra.mxu0 %v1119
        %1322 = vmatprep.subr.bf16.mxu0 0
        %1323 = vmatpush1.bf16.msra.mxu0 %v1116
        %1324 = vmatprep.subr.bf16.mxu0 0
        %1325 = vmatpush2.bf16.msra.mxu0 %v1161
        %1326 = vmatprep.subr.bf16.mxu0 0
        %1327 = vmatpush2.bf16.msra.mxu0 %v1158
        %1328 = vmatprep.subr.bf16.mxu0 0
        %1329 = vmatpush2.bf16.msra.mxu0 %v1155
        %1330 = vmatprep.subr.bf16.mxu0 0
        %1331 = vmatpush2.bf16.msra.mxu0 %v1152
        %1332 = vmatprep.subr.bf16.mxu0 0
        %1333 = vmatpush2.bf16.msra.mxu0 %v1149
        %1334 = vmatprep.subr.bf16.mxu0 0
        %1335 = vmatpush2.bf16.msra.mxu0 %v1146
        %1336 = vmatprep.subr.bf16.mxu0 0
        %1337 = vmatpush2.bf16.msra.mxu0 %v1143
        %1338 = vmatprep.subr.bf16.mxu0 0
        %1339 = vmatpush2.bf16.msra.mxu0 %v1140
        %1340 = vmatprep.mubr.bf16.mxu0 %v967
        %1341 = vmatmul.mubr.bf16.gmra.mxu0 %v966
        %v1342 = vpop.f32.mrf.mxu0
        %v1343 = vadd.f32 %v959, %v1342
        %v1344 = vpop.f32.mrf.mxu0
        %v1345 = vpop.f32.mrf.mxu0
        %v1346 = vpop.f32.mrf.mxu0
        %1347 = vdwg.mxu0
        %1348 = vmatprep.subr.bf16.mxu0 0
        %1349 = vmatpush1.bf16.msra.mxu0 0
        %1350 = vmatprep.subr.bf16.mxu0 0
        %1351 = vmatpush1.bf16.msra.mxu0 0
        %1352 = vmatprep.subr.bf16.mxu0 0
        %1353 = vmatpush1.bf16.msra.mxu0 0
        %1354 = vmatprep.subr.bf16.mxu0 0
        %1355 = vmatpush1.bf16.msra.mxu0 0
        %1356 = vmatprep.subr.bf16.mxu0 0
        %1357 = vmatpush1.bf16.msra.mxu0 0
        %1358 = vmatprep.subr.bf16.mxu0 0
        %1359 = vmatpush1.bf16.msra.mxu0 0
        %1360 = vmatprep.subr.bf16.mxu0 0
        %1361 = vmatpush1.bf16.msra.mxu0 %v1167
        %1362 = vmatprep.subr.bf16.mxu0 0
        %1363 = vmatpush1.bf16.msra.mxu0 %v1164
        %1364 = vmatprep.subr.bf16.mxu0 0
        %1365 = vmatpush2.bf16.msra.mxu0 0
        %1366 = vmatprep.subr.bf16.mxu0 0
        %1367 = vmatpush2.bf16.msra.mxu0 0
        %1368 = vmatprep.subr.bf16.mxu0 0
        %1369 = vmatpush2.bf16.msra.mxu0 0
        %1370 = vmatprep.subr.bf16.mxu0 0
        %1371 = vmatpush2.bf16.msra.mxu0 0
        %1372 = vmatprep.subr.bf16.mxu0 0
        %1373 = vmatpush2.bf16.msra.mxu0 0
        %1374 = vmatprep.subr.bf16.mxu0 0
        %1375 = vmatpush2.bf16.msra.mxu0 0
        %1376 = vmatprep.subr.bf16.mxu0 0
        %1377 = vmatpush2.bf16.msra.mxu0 0
        %1378 = vmatprep.subr.bf16.mxu0 0
        %1379 = vmatpush2.bf16.msra.mxu0 0
        %1380 = vmatprep.mubr.bf16.mxu0 0
        %1381 = vmatmul.mubr.bf16.gmra.mxu0 %v1224
        %v1382 = vpop.f32.mrf.mxu0
        %v1383 = vadd.f32 %v1343, %v1382
        %v1384 = vpop.f32.mrf.mxu0
        %v1385 = vpop.f32.mrf.mxu0
        %v1386 = vpop.f32.mrf.mxu0
        %1387 = vdwg.mxu0
        %vm1388 = vcmp.gt.f32.partialorder %v1302, 0.0
        %vm1389 = vcmp.gt.f32.partialorder %v1304, 0.0
        %vm1390 = vcmp.gt.f32.partialorder %v1383, 0.0
        %v1391 = vmul.f32 %v1302, 0.2
        %v1392 = vmul.f32 %v1304, 0.2
        %v1393 = vmul.f32 %v1383, 0.2
        %v1394 = vsel %vm1388, %v1302, %v1391
        %v1395 = vsel %vm1389, %v1304, %v1392
        %v1396 = vsel %vm1390, %v1383, %v1393
        %1397 = vst [vmem:[%s267] sm:$0xff] %v1394
        %1398 = vst [vmem:[%s267 + $0x8] sm:$0xff] %v1395
        %1399 = vst [vmem:[%s267 + $0x10] sm:$0xff] %v1396
        %s1400 = sand.u32 %s162, 1
        %s1401 = scalar_lea.sflag [#allocation4], %s1400
        %s1402 = sand.u32 %s162, 1
        %s1403 = smul.addr %s1402, 24
        %s1404 = scalar_lea.vmem [#allocation5], %s1403
        // Predicated region
        $region49: #{tpu_custom_call.1} parent=43 // pred_check
          %p1405 = pneg %p172
        $region50: #{tpu_custom_call.1} parent=43 // pred_check_branch
          %1407 = sbr.rel (%p1405) target = $region52
        $region51: #{tpu_custom_call.1} parent=43 // pred_region
          %s1409 = ssub.s32 384, 384
          %1410 = vsyncadd %s1401, %s1409
          %s1411 = smul.addr %s23, 3
          %s1412 = smul.addr %s1411, 128
          %s1413 = scalar_lea.hbm %s6, %s1412
          %s1415 = sshll.u32 %s1404, 4
          %s1416 = int_to_ptr.vmem [resolvable:$true] %s1415
          %1418 = dma.vmem_to_hbm [thread:$0]  %s1416, 384, %s1413, %s1401
        $region52: #{tpu_custom_call.1} parent=43 // pred_fallthru
          _
      $region44: #{tpu_custom_call.1} parent=5 // pred_fallthru
        _
      %p1419 = scmp.le.s32.totalorder 2, %s18
      // Predicated region
      $region53: #{tpu_custom_call.1} parent=5 // pred_check
        %p1420 = pneg %p1419
      $region54: #{tpu_custom_call.1} parent=5 // pred_check_branch
        %1422 = sbr.rel (%p1420) target = $region56
      $region55: #{tpu_custom_call.1} parent=5 // pred_region
        %s1423 = ssub.s32 %s18, 2
        // Predicated region
        $region57: #{tpu_custom_call.1} parent=55 // pred_check
          %p1424 = pneg %p178
        $region58: #{tpu_custom_call.1} parent=55 // pred_check_branch
          %1426 = sbr.rel (%p1424) target = $region60
        $region59: #{tpu_custom_call.1} parent=55 // pred_region
          %s1427 = sand.u32 %s163, 1
          %s1428 = scalar_lea.sflag [#allocation4], %s1427
          %s1429 = sand.u32 %s163, 1
          %s1430 = smul.addr %s1429, 24
          %s1431 = scalar_lea.vmem [#allocation5], %s1430
          %1432 = dma.done %s1428, 384
        $region60: #{tpu_custom_call.1} parent=55 // pred_fallthru
          _
      $region56: #{tpu_custom_call.1} parent=5 // pred_fallthru
        _
    $region6: #{tpu_custom_call.1} parent=1 // loop_footer
      %s22 = sadd.s32 1, %s18
    $region7: #{tpu_custom_call.1} parent=1 // loop_footer_branch
      %17 = sbr.rel target = $region3
    $region8: #{tpu_custom_call.1} parent=1 // loop_exit
      _
    %1433 = vsyncpa [#allocation3], 1
    %s1434 = scalar_lea.sflag [#allocation3], 1
    %1435 = vsyncpa %s1434, 1
    %1436 = vsyncpa [#allocation4], 1
    %s1437 = scalar_lea.sflag [#allocation4], 1
    %1438 = vsyncpa %s1437, 1

</llo_original>
